<compile_context>
chip_gen: v6e
topology: v6e:2x2x1
jax: 0.10.0
libtpu: 0.0.40
codegen_flags: <defaults>
</compile_context>

<pallas_src>
import functools
import numpy as np
import jax
import jax.numpy as jnp
from jax.experimental import pallas as pl
from jax.experimental.pallas import tpu as pltpu


# ----------------------------------------------------------------------------- kernels

def _encoder_fused_kernel(Q, Wp, x_ref, w1t_ref, b1_ref, mask_ref, w2t_ref, b2_ref, o_ref):
    """Fused hintmap_encoder, channel-major layout (channels on sublanes, positions on lanes).

    Per grid step n (batch index):
      x_ref    : (1, Kin, P1) bf16  space-to-depth(2) heatmaps, channel-concat of all maps,
                                    zero pad ring + one trailing zero column (P1 = (Ho+1)*(Wo+1)+1)
      w1t_ref  : (64, Kin)    bf16  block-diagonal 1x1-conv weights (4 s2d groups), transposed
      b1_ref   : (64, 1)      f32   conv1 bias tiled over the 4 s2d groups
      mask_ref : (1, P1)      f32   zeros on the conv2 padding ring / tail column
      w2t_ref  : (64, 256)    bf16  3x3/s2 weights regrouped into 4 stacked taps, |scale| folded
      b2_ref   : (64, 1)      f32   conv2 bias with |scale| folded
      o_ref    : (1, 64, Q)   f32   channel-major padded-flat output (junk col dropped in wrapper)
    """
    # Conv1x1 over the folded channel concat: one matmul, f32 accumulation.
    y = jnp.dot(w1t_ref[...], x_ref[0], preferred_element_type=jnp.float32)    # (64, P1) f32
    y = y + b1_ref[...]
    y = jnp.maximum(y, 0.2 * y)                        # LeakyReLU(0.2)
    y = (y * mask_ref[...]).astype(w2t_ref.dtype)      # zero the conv2 pad ring; bf16 operand

    # Conv3x3 stride-2 pad-1 == 4 lane-shifted taps on the s2d grid, fused into one K=256 dot.
    x2 = jnp.concatenate([y[:, 0:Q], y[:, 1:1 + Q],
                          y[:, Wp:Wp + Q], y[:, Wp + 1:Wp + 1 + Q]], axis=0)    # (256, Q) bf16
    acc = jnp.dot(w2t_ref[...], x2, preferred_element_type=jnp.float32)         # (64, Q) f32

    # Conv2 bias (ScaleLayer |scale| already folded into w2t / b2col).
    o_ref[0] = acc + b2_ref[...]


def _upsample_kernel(Cb, h, x_ref, rh_ref, rwt_ref, o_ref):
    """align_corners=True bilinear: out[c] = Rh @ x[c] @ Rw^T for one block of Cb channels."""
    xw = jnp.dot(x_ref[0], rwt_ref[...], preferred_element_type=jnp.float32)    # (Cb*h, W)
    rh = rh_ref[...]
    H = rh.shape[0]
    for c in range(Cb):                                 # unrolled; M just streams through the MXU
        o_ref[0, c * H:(c + 1) * H, :] = jnp.dot(
            rh, xw[c * h:(c + 1) * h, :], preferred_element_type=jnp.float32)


# ----------------------------------------------------------------------------- wrappers

def _space_to_depth_cmajor(heatmaps, Ho, Wo):
    """list of (N, C, H, W) -> (N, n_maps*4*C, (Ho+1)*(Wo+1)+1) channel-major s2d layout.

    Channel index = m*4C + g*C + c with sub-pixel group g = 2*r + cc.  A zero ring (top row /
    left col of the s2d grid) plus one trailing zero column are included for the stride-2 conv."""
    N = heatmaps[0].shape[0]
    xs = []
    for t in heatmaps:
        C = t.shape[1]
        x = t.reshape(N, C, Ho, 2, Wo, 2)
        x = jnp.transpose(x, (0, 3, 5, 1, 2, 4)).reshape(N, 4 * C, Ho, Wo)
        xs.append(x)
    x = jnp.concatenate(xs, axis=1)                                  # (N, Kin, Ho, Wo)
    x = jnp.pad(x, ((0, 0), (0, 0), (1, 0), (1, 0)))                 # s2d zero ring
    x = x.reshape(N, x.shape[1], (Ho + 1) * (Wo + 1))
    return jnp.pad(x, ((0, 0), (0, 0), (0, 1)))                      # trailing zero column


def hintmap_encoder(heatmaps, params):
    """nn.Sequential(Conv1x1, LeakyReLU(0.2), Conv3x3 s2 p1, ScaleLayer(0.05)), fully fused.

    `heatmaps` is the list whose channel-concat is the encoder input; the concat is folded into
    a block-diagonal weight so the (N, 2K, H, W) concat tensor is never materialized."""
    N, _, H, W = heatmaps[0].shape
    assert H % 2 == 0 and W % 2 == 0
    Ho, Wo = H // 2, W // 2
    Wp = Wo + 1
    P = (Ho + 1) * Wp          # padded-flat spatial positions of the conv1 activation
    P1 = P + 1                 # + one trailing zero column for the last conv2 tap
    Q = Ho * Wp                # padded-flat output columns (one junk col per row, dropped later)

    chans = [hm.shape[1] for hm in heatmaps]
    C = chans[0]
    assert all(c == C for c in chans)
    n_maps = len(heatmaps)
    Kin = n_maps * 4 * C

    w1 = params["w1"][:, :, 0, 0]                          # (16, n_maps*C)
    assert w1.shape[1] == n_maps * C, "conv1x1 in_channels mismatch with provided heatmaps"

    # transposed block-diagonal 1x1 weights over the 4 space-to-depth groups: (64, Kin)
    w1bd = jnp.zeros((Kin, 64), jnp.float32)
    for m in range(n_maps):
        wt = jnp.transpose(w1[:, m * C:(m + 1) * C])       # (C, 16)
        for g in range(4):
            w1bd = w1bd.at[m * 4 * C + g * C: m * 4 * C + (g + 1) * C,
                           g * 16:(g + 1) * 16].set(wt)
    w1t = jnp.transpose(w1bd).astype(jnp.bfloat16)         # (64, Kin)
    b1col = jnp.tile(params["b1"], 4).reshape(64, 1)       # f32

    # regroup torch (64, 16, 3, 3) 3x3/s2 weights into 4 stacked 64->64 taps; fold |scale| in.
    w2 = params["w2"]
    w2s2d = jnp.zeros((4, 64, 64), jnp.float32)
    for ky in range(3):
        a, r = ((0, 1), (1, 0), (1, 1))[ky]
        for kx in range(3):
            b, cc = ((0, 1), (1, 0), (1, 1))[kx]
            w2s2d = w2s2d.at[a * 2 + b, (r * 2 + cc) * 16:(r * 2 + cc + 1) * 16, :].set(
                jnp.transpose(w2[:, :, ky, kx]))
    s = jnp.abs(params["scale"][0] * 1.0)                  # ScaleLayer, lr_mult = 1
    w2t = (jnp.transpose(w2s2d.reshape(256, 64)) * s).astype(jnp.bfloat16)   # (64, 256)
    b2col = (params["b2"] * s).reshape(64, 1)              # f32

    # zero mask for the conv2 padding ring (row 0 / col 0 of the padded s2d grid) + tail column.
    mnp = np.ones((Ho + 1, Wp), np.float32)
    mnp[0, :] = 0.0
    mnp[:, 0] = 0.0
    mask = jnp.asarray(np.concatenate([mnp.reshape(1, P),
                                       np.zeros((1, 1), np.float32)], axis=1))   # (1, P1)

    x = _space_to_depth_cmajor(heatmaps, Ho, Wo).astype(jnp.bfloat16)   # (N, Kin, P1)

    flops = N * (2 * 64 * Kin * P1 + 2 * 64 * 256 * Q)
    bytes_accessed = (2 * N * Kin * P1 + 4 * N * 64 * Q
                      + 2 * (64 * Kin + 64 * 256) + 4 * (P1 + 128))

    out = pl.pallas_call(
        functools.partial(_encoder_fused_kernel, Q, Wp),
        out_shape=jax.ShapeDtypeStruct((N, 64, Q), jnp.float32),
        grid=(N,),
        in_specs=[pl.BlockSpec((1, Kin, P1), lambda n: (n, 0, 0)),
                  pl.BlockSpec((64, Kin), lambda n: (0, 0)),
                  pl.BlockSpec((64, 1), lambda n: (0, 0)),
                  pl.BlockSpec((1, P1), lambda n: (0, 0)),
                  pl.BlockSpec((64, 256), lambda n: (0, 0)),
                  pl.BlockSpec((64, 1), lambda n: (0, 0))],
        out_specs=pl.BlockSpec((1, 64, Q), lambda n: (n, 0, 0)),
        compiler_params=pltpu.CompilerParams(
            dimension_semantics=("parallel",),
            vmem_limit_bytes=48 * 1024 * 1024),
        cost_estimate=pl.CostEstimate(flops=flops, transcendentals=0,
                                      bytes_accessed=bytes_accessed),
    )(x, w1t, b1col, mask, w2t, b2col)

    # drop the junk column of the padded-flat layout; output is already channel-major (NCHW).
    return out.reshape(N, 64, Ho, Wp)[:, :, :, :Wo]         # (N, 64, H/2, W/2)


def _interp_matrix(out_size, in_size):
    """Row-stochastic bilinear interpolation matrix, align_corners=True semantics."""
    R = np.zeros((out_size, in_size), dtype=np.float32)
    if out_size == 1 or in_size == 1:
        R[:, 0] = 1.0
        return jnp.asarray(R)
    scale = (in_size - 1) / (out_size - 1)
    for i in range(out_size):
        src = i * scale
        p0 = min(int(np.floor(src)), in_size - 1)
        p1 = min(p0 + 1, in_size - 1)
        frac = src - p0
        R[i, p0] += 1.0 - frac
        R[i, p1] += frac
    return jnp.asarray(R)


def bilinear_upsample_nchw(x, out_hw):
    """F.interpolate(x, size=out_hw, mode='bilinear', align_corners=True) as Rh @ x @ Rw^T,
    one (batch, channel-block) per grid step.  Output lanes are W-wide (dense for real RITM
    image sizes that are multiples of 128; masked only at toy sizes)."""
    N, C, h, w = x.shape
    H, W = out_hw
    Rh = _interp_matrix(H, h)                      # (H, h), VMEM-resident constant
    RwT = jnp.transpose(_interp_matrix(W, w))      # (w, W), VMEM-resident constant

    # channel blocking: >=2 parallel steps even at N == 1 (v7x dual TC), fewer grid steps overall
    nCb = 2 if (C % 2 == 0 and ((C // 2) * h) % 8 == 0 and ((C // 2) * H) % 8 == 0) else 1
    Cb = C // nCb
    xf = x.reshape(N, C * h, w)

    flops = N * C * 2 * (h * w * W + H * h * W)
    bytes_accessed = 4 * (N * C * (h * w + H * W) + H * h + w * W)

    out = pl.pallas_call(
        functools.partial(_upsample_kernel, Cb, h),
        out_shape=jax.ShapeDtypeStruct((N, C * H, W), jnp.float32),
        grid=(N, nCb),
        in_specs=[pl.BlockSpec((1, Cb * h, w), lambda n, cb: (n, cb, 0)),
                  pl.BlockSpec((H, h), lambda n, cb: (0, 0)),
                  pl.BlockSpec((w, W), lambda n, cb: (0, 0))],
        out_specs=pl.BlockSpec((1, Cb * H, W), lambda n, cb: (n, cb, 0)),
        compiler_params=pltpu.CompilerParams(
            dimension_semantics=("parallel", "parallel"),
            vmem_limit_bytes=48 * 1024 * 1024),
        cost_estimate=pl.CostEstimate(flops=flops, transcendentals=0,
                                      bytes_accessed=bytes_accessed),
    )(xf, Rh, RwT)
    return out.reshape(N, C, H, W)


def ritm_forward_model(input_image, input_hint_heatmap, prev_pred_heatmap, params,
                       image_size, backbone_stub):
    """RITM.forward_model: hint concat (folded) -> hintmap_encoder -> backbone -> upsample."""
    if prev_pred_heatmap is None:
        heatmaps = [input_hint_heatmap]
    else:
        heatmaps = [prev_pred_heatmap, input_hint_heatmap]   # torch.cat((prev, hint), dim=1)

    encoded_hint = hintmap_encoder(heatmaps, params)          # (N, 64, H/2, W/2)

    # TODO(synk): HighResolutionNet(width=32, ocr_width=128, SE hint fusion) not translated;
    # deterministic stub supplies low-res logits and consumes encoded_hint.
    pred_logit_lr, aux_pred_logit_lr = backbone_stub(encoded_hint)

    pred_logit = bilinear_upsample_nchw(pred_logit_lr, image_size)
    aux_pred_logit = bilinear_upsample_nchw(aux_pred_logit_lr, image_size)
    return pred_logit, aux_pred_logit, encoded_hint


# ----------------------------------------------------------------------------- reference

def _encoder_reference(hint_features, params):
    y = jax.lax.conv_general_dilated(
        hint_features, params["w1"], (1, 1), "VALID",
        dimension_numbers=("NCHW", "OIHW", "NCHW"))
    y = y + params["b1"][None, :, None, None]
    y = jnp.where(y >= 0, y, 0.2 * y)
    y = jax.lax.conv_general_dilated(
        y, params["w2"], (2, 2), ((1, 1), (1, 1)),
        dimension_numbers=("NCHW", "OIHW", "NCHW"))
    y = y + params["b2"][None, :, None, None]
    return y * jnp.abs(params["scale"][0] * 1.0)


# ----------------------------------------------------------------------------- main

if __name__ == "__main__":
    N = 2                 # batch
    K = 4                 # config.Dataset.num_keypoint
    H = W = 16            # config.Dataset.image_size
    IMG_C = 3

    key = jax.random.PRNGKey(0)
    k_img, k_hint, k_w1, k_b1, k_w2, k_b2, k_bb = jax.random.split(key, 7)

    input_image = jax.random.normal(k_img, (N, IMG_C, H, W), dtype=jnp.float32)
    input_hint_heatmap = jax.random.uniform(k_hint, (N, K, H, W), dtype=jnp.float32)
    prev_pred_heatmap = jnp.zeros_like(input_hint_heatmap)    # eval path, no prev_heatmap

    params = {
        "w1": jax.random.normal(k_w1, (16, 2 * K, 1, 1), dtype=jnp.float32) * 0.1,
        "b1": jax.random.normal(k_b1, (16,), dtype=jnp.float32) * 0.01,
        "w2": jax.random.normal(k_w2, (64, 16, 3, 3), dtype=jnp.float32) * 0.05,
        "b2": jax.random.normal(k_b2, (64,), dtype=jnp.float32) * 0.01,
        "scale": jnp.asarray([0.05], dtype=jnp.float32),      # ScaleLayer(0.05, lr_mult=1)
    }

    # deterministic stand-in for the untranslated HRNet backbone: 1/4-resolution logits
    _bb_logits = jax.random.normal(k_bb, (N, K, H // 4, W // 4), dtype=jnp.float32)

    def backbone_stub(encoded_hint):
        bias = jnp.mean(encoded_hint)                          # ties stub to encoder output
        return _bb_logits + bias, 0.5 * _bb_logits + bias

    fwd = jax.jit(lambda img, hint, prev, p: ritm_forward_model(
        img, hint, prev, p, image_size=(H, W), backbone_stub=backbone_stub))

    pred_logit, aux_pred_logit, encoded_hint = fwd(
        input_image, input_hint_heatmap, prev_pred_heatmap, params)
    jax.block_until_ready((pred_logit, aux_pred_logit, encoded_hint))

    # ---- correctness self-checks vs pure-JAX references
    hint_features = jnp.concatenate((prev_pred_heatmap, input_hint_heatmap), axis=1)
    ref_enc = _encoder_reference(hint_features, params)
    assert encoded_hint.shape == (N, 64, H // 2, W // 2)
    assert pred_logit.shape == (N, K, H, W) and aux_pred_logit.shape == (N, K, H, W)
    # bf16 MXU operands (f32 accumulation) => slightly looser tolerance than pure f32
    assert jnp.allclose(encoded_hint, ref_enc, atol=2e-3, rtol=2e-2), "encoder mismatch"

    pred_lr, _ = backbone_stub(encoded_hint)
    Rh = _interp_matrix(H, H // 4)
    Rw = _interp_matrix(W, W // 4)
    ref_up = jnp.einsum("Ij,ncjk,Lk->ncIL", Rh, pred_lr, Rw)
    assert jnp.allclose(pred_logit, ref_up, atol=1e-4, rtol=1e-4), "upsample mismatch"

    print("KERNEL_OK")
</pallas_src>

<mosaic_0001>
module attributes {stable_mosaic.version = 11 : i64} {
  func.func @_encoder_fused_kernel(%arg0: i32, %arg1: memref<1x32x82xbf16, #tpu.memory_space<vmem>>, %arg2: memref<64x32xbf16, #tpu.memory_space<vmem>>, %arg3: memref<64x1xf32, #tpu.memory_space<vmem>>, %arg4: memref<1x82xf32, #tpu.memory_space<vmem>>, %arg5: memref<64x256xbf16, #tpu.memory_space<vmem>>, %arg6: memref<64x1xf32, #tpu.memory_space<vmem>>, %arg7: memref<1x64x72xf32, #tpu.memory_space<vmem>>) attributes {dimension_semantics = [#tpu.dimension_semantics<parallel>], iteration_bounds = array<i64: 2>, scalar_prefetch = 0 : i64, scratch_operands = 0 : i64, tpu.core_type = #tpu.core_type<tc>, window_params = [{transform_indices = @transform_0, window_bounds = array<i64: 1, 32, 82>}, {pipeline_mode = #tpu.pipeline_mode<synchronous>, transform_indices = @transform_1, window_bounds = array<i64: 64, 32>}, {pipeline_mode = #tpu.pipeline_mode<synchronous>, transform_indices = @transform_2, window_bounds = array<i64: 64, 1>}, {pipeline_mode = #tpu.pipeline_mode<synchronous>, transform_indices = @transform_3, window_bounds = array<i64: 1, 82>}, {pipeline_mode = #tpu.pipeline_mode<synchronous>, transform_indices = @transform_4, window_bounds = array<i64: 64, 256>}, {pipeline_mode = #tpu.pipeline_mode<synchronous>, transform_indices = @transform_5, window_bounds = array<i64: 64, 1>}, {transform_indices = @transform_6, window_bounds = array<i64: 1, 64, 72>}]} {
    %c0 = arith.constant 0 : index
    %c0_0 = arith.constant 0 : index
    %0 = vector.load %arg2[%c0, %c0_0] : memref<64x32xbf16, #tpu.memory_space<vmem>>, vector<64x32xbf16>
    %c0_1 = arith.constant 0 : index
    %c0_2 = arith.constant 0 : index
    %c0_3 = arith.constant 0 : index
    %1 = vector.load %arg1[%c0_1, %c0_2, %c0_3] : memref<1x32x82xbf16, #tpu.memory_space<vmem>>, vector<1x32x82xbf16>
    %2 = vector.shape_cast %1 : vector<1x32x82xbf16> to vector<32x82xbf16>
    %cst = arith.constant dense<0.000000e+00> : vector<64x82xf32>
    %3 = tpu.matmul %0, %2, %cst {dimension_numbers = #tpu.dot_dimension_numbers<[1], [0], [0], [1], [0, 0, 1, 1], [], []>} : vector<64x32xbf16>, vector<32x82xbf16>, vector<64x82xf32> -> vector<64x82xf32>
    %c0_4 = arith.constant 0 : index
    %c0_5 = arith.constant 0 : index
    %4 = vector.load %arg3[%c0_4, %c0_5] : memref<64x1xf32, #tpu.memory_space<vmem>>, vector<64x1xf32>
    %5 = vector.broadcast %4 : vector<64x1xf32> to vector<64x82xf32>
    %6 = arith.addf %3, %5 : vector<64x82xf32>
    %cst_6 = arith.constant 2.000000e-01 : f32
    %7 = vector.broadcast %cst_6 : f32 to vector<64x82xf32>
    %8 = arith.mulf %7, %6 : vector<64x82xf32>
    %9 = arith.maximumf %6, %8 : vector<64x82xf32>
    %c0_7 = arith.constant 0 : index
    %c0_8 = arith.constant 0 : index
    %10 = vector.load %arg4[%c0_7, %c0_8] : memref<1x82xf32, #tpu.memory_space<vmem>>, vector<1x82xf32>
    %11 = vector.broadcast %10 : vector<1x82xf32> to vector<64x82xf32>
    %12 = arith.mulf %9, %11 : vector<64x82xf32>
    %13 = arith.truncf %12 : vector<64x82xf32> to vector<64x82xbf16>
    %14 = vector.extract_strided_slice %13 {offsets = [0, 0], sizes = [64, 72], strides = [1, 1]} : vector<64x82xbf16> to vector<64x72xbf16>
    %15 = vector.extract_strided_slice %13 {offsets = [0, 1], sizes = [64, 72], strides = [1, 1]} : vector<64x82xbf16> to vector<64x72xbf16>
    %16 = vector.extract_strided_slice %13 {offsets = [0, 9], sizes = [64, 72], strides = [1, 1]} : vector<64x82xbf16> to vector<64x72xbf16>
    %17 = vector.extract_strided_slice %13 {offsets = [0, 10], sizes = [64, 72], strides = [1, 1]} : vector<64x82xbf16> to vector<64x72xbf16>
    %18 = tpu.concatenate %14, %15, %16, %17 in 0 : vector<64x72xbf16>, vector<64x72xbf16>, vector<64x72xbf16>, vector<64x72xbf16> -> vector<256x72xbf16>
    %c0_9 = arith.constant 0 : index
    %c0_10 = arith.constant 0 : index
    %19 = vector.load %arg5[%c0_9, %c0_10] : memref<64x256xbf16, #tpu.memory_space<vmem>>, vector<64x256xbf16>
    %cst_11 = arith.constant dense<0.000000e+00> : vector<64x72xf32>
    %20 = tpu.matmul %19, %18, %cst_11 {dimension_numbers = #tpu.dot_dimension_numbers<[1], [0], [0], [1], [0, 0, 1, 1], [], []>} : vector<64x256xbf16>, vector<256x72xbf16>, vector<64x72xf32> -> vector<64x72xf32>
    %c0_12 = arith.constant 0 : index
    %c0_13 = arith.constant 0 : index
    %21 = vector.load %arg6[%c0_12, %c0_13] : memref<64x1xf32, #tpu.memory_space<vmem>>, vector<64x1xf32>
    %22 = vector.broadcast %21 : vector<64x1xf32> to vector<64x72xf32>
    %23 = arith.addf %20, %22 : vector<64x72xf32>
    %c0_14 = arith.constant 0 : index
    %c0_15 = arith.constant 0 : index
    %c0_16 = arith.constant 0 : index
    %24 = vector.load %arg7[%c0_14, %c0_15, %c0_16] : memref<1x64x72xf32, #tpu.memory_space<vmem>>, vector<1x64x72xf32>
    %25 = vector.shape_cast %24 : vector<1x64x72xf32> to vector<64x72xf32>
    %26 = vector.shape_cast %23 : vector<64x72xf32> to vector<1x64x72xf32>
    tpu.vector_store %arg7[%c0_14, %c0_15, %c0_16], %26 {strides = array<i32>} : memref<1x64x72xf32, #tpu.memory_space<vmem>>, vector<1x64x72xf32>,
    return
  }
  func.func @transform_0(%arg0: i32) -> (i32, i32, i32) {
    %c0_i32 = arith.constant 0 : i32
    %c0_i32_0 = arith.constant 0 : i32
    %c0_i32_1 = arith.constant 0 : i32
    return %arg0, %c0_i32, %c0_i32_0 : i32, i32, i32
  }
  func.func @transform_1(%arg0: i32) -> (i32, i32) {
    %c0_i32 = arith.constant 0 : i32
    %c0_i32_0 = arith.constant 0 : i32
    %c0_i32_1 = arith.constant 0 : i32
    return %c0_i32, %c0_i32_0 : i32, i32
  }
  func.func @transform_2(%arg0: i32) -> (i32, i32) {
    %c0_i32 = arith.constant 0 : i32
    %c0_i32_0 = arith.constant 0 : i32
    %c0_i32_1 = arith.constant 0 : i32
    return %c0_i32, %c0_i32_0 : i32, i32
  }
  func.func @transform_3(%arg0: i32) -> (i32, i32) {
    %c0_i32 = arith.constant 0 : i32
    %c0_i32_0 = arith.constant 0 : i32
    %c0_i32_1 = arith.constant 0 : i32
    return %c0_i32, %c0_i32_0 : i32, i32
  }
  func.func @transform_4(%arg0: i32) -> (i32, i32) {
    %c0_i32 = arith.constant 0 : i32
    %c0_i32_0 = arith.constant 0 : i32
    %c0_i32_1 = arith.constant 0 : i32
    return %c0_i32, %c0_i32_0 : i32, i32
  }
  func.func @transform_5(%arg0: i32) -> (i32, i32) {
    %c0_i32 = arith.constant 0 : i32
    %c0_i32_0 = arith.constant 0 : i32
    %c0_i32_1 = arith.constant 0 : i32
    return %c0_i32, %c0_i32_0 : i32, i32
  }
  func.func @transform_6(%arg0: i32) -> (i32, i32, i32) {
    %c0_i32 = arith.constant 0 : i32
    %c0_i32_0 = arith.constant 0 : i32
    %c0_i32_1 = arith.constant 0 : i32
    return %arg0, %c0_i32, %c0_i32_0 : i32, i32, i32
  }
}

module attributes {stable_mosaic.version = 11 : i64} {
  func.func @_upsample_kernel(%arg0: i32, %arg1: i32, %arg2: memref<1x8x4xf32, #tpu.memory_space<vmem>>, %arg3: memref<16x4xf32, #tpu.memory_space<vmem>>, %arg4: memref<4x16xf32, #tpu.memory_space<vmem>>, %arg5: memref<1x32x16xf32, #tpu.memory_space<vmem>>) attributes {dimension_semantics = [#tpu.dimension_semantics<parallel>, #tpu.dimension_semantics<parallel>], iteration_bounds = array<i64: 2, 2>, scalar_prefetch = 0 : i64, scratch_operands = 0 : i64, tpu.core_type = #tpu.core_type<tc>, window_params = [{transform_indices = @transform_0, window_bounds = array<i64: 1, 8, 4>}, {pipeline_mode = #tpu.pipeline_mode<synchronous>, transform_indices = @transform_1, window_bounds = array<i64: 16, 4>}, {pipeline_mode = #tpu.pipeline_mode<synchronous>, transform_indices = @transform_2, window_bounds = array<i64: 4, 16>}, {transform_indices = @transform_3, window_bounds = array<i64: 1, 32, 16>}]} {
    %c0 = arith.constant 0 : index
    %c0_0 = arith.constant 0 : index
    %c0_1 = arith.constant 0 : index
    %0 = vector.load %arg2[%c0, %c0_0, %c0_1] : memref<1x8x4xf32, #tpu.memory_space<vmem>>, vector<1x8x4xf32>
    %1 = vector.shape_cast %0 : vector<1x8x4xf32> to vector<8x4xf32>
    %c0_2 = arith.constant 0 : index
    %c0_3 = arith.constant 0 : index
    %2 = vector.load %arg4[%c0_2, %c0_3] : memref<4x16xf32, #tpu.memory_space<vmem>>, vector<4x16xf32>
    %cst = arith.constant dense<0.000000e+00> : vector<8x16xf32>
    %3 = tpu.matmul %1, %2, %cst {dimension_numbers = #tpu.dot_dimension_numbers<[1], [0], [0], [1], [0, 0, 1, 1], [], []>} : vector<8x4xf32>, vector<4x16xf32>, vector<8x16xf32> -> vector<8x16xf32>
    %c0_4 = arith.constant 0 : index
    %c0_5 = arith.constant 0 : index
    %4 = vector.load %arg3[%c0_4, %c0_5] : memref<16x4xf32, #tpu.memory_space<vmem>>, vector<16x4xf32>
    %5 = vector.extract_strided_slice %3 {offsets = [0, 0], sizes = [4, 16], strides = [1, 1]} : vector<8x16xf32> to vector<4x16xf32>
    %cst_6 = arith.constant dense<0.000000e+00> : vector<16x16xf32>
    %6 = tpu.matmul %4, %5, %cst_6 {dimension_numbers = #tpu.dot_dimension_numbers<[1], [0], [0], [1], [0, 0, 1, 1], [], []>} : vector<16x4xf32>, vector<4x16xf32>, vector<16x16xf32> -> vector<16x16xf32>
    %c0_7 = arith.constant 0 : index
    %c0_8 = arith.constant 0 : index
    %c0_9 = arith.constant 0 : index
    %7 = vector.load %arg5[%c0_7, %c0_8, %c0_9] : memref<1x32x16xf32, #tpu.memory_space<vmem>>, vector<1x16x16xf32>
    %8 = vector.shape_cast %7 : vector<1x16x16xf32> to vector<16x16xf32>
    %9 = vector.shape_cast %6 : vector<16x16xf32> to vector<1x16x16xf32>
    tpu.vector_store %arg5[%c0_7, %c0_8, %c0_9], %9 {strides = array<i32>} : memref<1x32x16xf32, #tpu.memory_space<vmem>>, vector<1x16x16xf32>,
    %10 = vector.extract_strided_slice %3 {offsets = [4, 0], sizes = [4, 16], strides = [1, 1]} : vector<8x16xf32> to vector<4x16xf32>
    %cst_10 = arith.constant dense<0.000000e+00> : vector<16x16xf32>
    %11 = tpu.matmul %4, %10, %cst_10 {dimension_numbers = #tpu.dot_dimension_numbers<[1], [0], [0], [1], [0, 0, 1, 1], [], []>} : vector<16x4xf32>, vector<4x16xf32>, vector<16x16xf32> -> vector<16x16xf32>
    %c0_11 = arith.constant 0 : index
    %c16 = arith.constant 16 : index
    %c0_12 = arith.constant 0 : index
    %12 = vector.load %arg5[%c0_11, %c16, %c0_12] : memref<1x32x16xf32, #tpu.memory_space<vmem>>, vector<1x16x16xf32>
    %13 = vector.shape_cast %12 : vector<1x16x16xf32> to vector<16x16xf32>
    %14 = vector.shape_cast %11 : vector<16x16xf32> to vector<1x16x16xf32>
    tpu.vector_store %arg5[%c0_11, %c16, %c0_12], %14 {strides = array<i32>} : memref<1x32x16xf32, #tpu.memory_space<vmem>>, vector<1x16x16xf32>,
    return
  }
  func.func @transform_0(%arg0: i32, %arg1: i32) -> (i32, i32, i32) {
    %c0_i32 = arith.constant 0 : i32
    %c0_i32_0 = arith.constant 0 : i32
    return %arg0, %arg1, %c0_i32 : i32, i32, i32
  }
  func.func @transform_1(%arg0: i32, %arg1: i32) -> (i32, i32) {
    %c0_i32 = arith.constant 0 : i32
    %c0_i32_0 = arith.constant 0 : i32
    %c0_i32_1 = arith.constant 0 : i32
    return %c0_i32, %c0_i32_0 : i32, i32
  }
  func.func @transform_2(%arg0: i32, %arg1: i32) -> (i32, i32) {
    %c0_i32 = arith.constant 0 : i32
    %c0_i32_0 = arith.constant 0 : i32
    %c0_i32_1 = arith.constant 0 : i32
    return %c0_i32, %c0_i32_0 : i32, i32
  }
  func.func @transform_3(%arg0: i32, %arg1: i32) -> (i32, i32, i32) {
    %c0_i32 = arith.constant 0 : i32
    %c0_i32_0 = arith.constant 0 : i32
    return %arg0, %arg1, %c0_i32 : i32, i32, i32
  }
}

</mosaic_0001>

<llo_original>
// kernel: tile.8
$region0: #{tile.8}
  #allocation0 [shape = 's32[1]{0}', space=sflag, size = 0x4, scoped, tag = 'scoped memory for tile.8']
  %s0 = inlined_call_operand.vmem [shape: f32[16], index: 0, kind: input, shape index: {}]
  %s1 = inlined_call_operand.vmem [shape: f32[4,16], index: 1, kind: output, shape index: {}]
  // Predicated region
  $region2: #{tile.8} parent=0 // pred_check
    _
  $region3: #{tile.8} parent=0 // pred_check_branch
    %3 = sbr.rel (0) target = $region5
  $region4: #{tile.8} parent=0 // pred_region
    _
  $region5: #{tile.8} parent=0 // pred_fallthru
    _
  %v4 = vld [vmem:[%s0] ss:$0 sm:$0xff]
  %5 = vst [vmem:[%s1] sm:$0xf] %v4

// kernel: tile.0
$region0: #{tile.0}
  %s0 = inlined_call_operand.vmem [shape: f32[4,16], index: 0, kind: input, shape index: {}]
  %s1 = inlined_call_operand.vmem [shape: f32[64,1], index: 1, kind: output, shape index: {}]
  $region1: #{tile.0} parent=0
    #allocation0 [shape = 'u8[4096]{0}', space=vmem, size = 0x1000, scoped, tag = 'scoped mem for input reshape']
    %s3 = sshll.u32 1, 4
    %s4 = ssub.s32 %s3, 1
    %v5 = vld [vmem:[%s0] sm:%s4]
    %6 = vst [vmem:[#allocation0] sm:%s4] %v5
    %v7 = vld [vmem:[#allocation0] sm:$0xf]
    %vm8 = vcmask 7168
    %9 = vst.msk [vmem:[%s1] ss:$16 sm:$0x3] %vm8, %v7
    %10 = vst.msk [vmem:[%s1] ss:$16 sm:$0xc] %vm8, %v7
    %v11 = vld [vmem:[#allocation0] sm:$0xf]
    %12 = vrot.lane.b32.xlu0 %v11, 127
    %v13 = vpop.permute.xlu0 %12
    %vm14 = vcmask 7168
    %s15 = scalar_lea.vmem %s1, 1
    %16 = vst.msk [vmem:[%s15] ss:$16 sm:$0x3] %vm14, %v13
    %s17 = scalar_lea.vmem %s1, 1
    %18 = vst.msk [vmem:[%s17] ss:$16 sm:$0xc] %vm14, %v13
    %v19 = vld [vmem:[#allocation0] sm:$0xf]
    %20 = vrot.lane.b32.xlu0 %v19, 126
    %v21 = vpop.permute.xlu0 %20
    %vm22 = vcmask 7168
    %s23 = scalar_lea.vmem %s1, 2
    %24 = vst.msk [vmem:[%s23] ss:$16 sm:$0x3] %vm22, %v21
    %s25 = scalar_lea.vmem %s1, 2
    %26 = vst.msk [vmem:[%s25] ss:$16 sm:$0xc] %vm22, %v21
    %v27 = vld [vmem:[#allocation0] sm:$0xf]
    %28 = vrot.lane.b32.xlu0 %v27, 125
    %v29 = vpop.permute.xlu0 %28
    %vm30 = vcmask 7168
    %s31 = scalar_lea.vmem %s1, 3
    %32 = vst.msk [vmem:[%s31] ss:$16 sm:$0x3] %vm30, %v29
    %s33 = scalar_lea.vmem %s1, 3
    %34 = vst.msk [vmem:[%s33] ss:$16 sm:$0xc] %vm30, %v29
    %v35 = vld [vmem:[#allocation0] sm:$0xf]
    %36 = vrot.lane.b32.xlu0 %v35, 124
    %v37 = vpop.permute.xlu0 %36
    %vm38 = vcmask 7168
    %s39 = scalar_lea.vmem %s1, 4
    %40 = vst.msk [vmem:[%s39] ss:$16 sm:$0x3] %vm38, %v37
    %s41 = scalar_lea.vmem %s1, 4
    %42 = vst.msk [vmem:[%s41] ss:$16 sm:$0xc] %vm38, %v37
    %v43 = vld [vmem:[#allocation0] sm:$0xf]
    %44 = vrot.lane.b32.xlu0 %v43, 123
    %v45 = vpop.permute.xlu0 %44
    %vm46 = vcmask 7168
    %s47 = scalar_lea.vmem %s1, 5
    %48 = vst.msk [vmem:[%s47] ss:$16 sm:$0x3] %vm46, %v45
    %s49 = scalar_lea.vmem %s1, 5
    %50 = vst.msk [vmem:[%s49] ss:$16 sm:$0xc] %vm46, %v45
    %v51 = vld [vmem:[#allocation0] sm:$0xf]
    %52 = vrot.lane.b32.xlu0 %v51, 122
    %v53 = vpop.permute.xlu0 %52
    %vm54 = vcmask 7168
    %s55 = scalar_lea.vmem %s1, 6
    %56 = vst.msk [vmem:[%s55] ss:$16 sm:$0x3] %vm54, %v53
    %s57 = scalar_lea.vmem %s1, 6
    %58 = vst.msk [vmem:[%s57] ss:$16 sm:$0xc] %vm54, %v53
    %v59 = vld [vmem:[#allocation0] sm:$0xf]
    %60 = vrot.lane.b32.xlu0 %v59, 121
    %v61 = vpop.permute.xlu0 %60
    %vm62 = vcmask 7168
    %s63 = scalar_lea.vmem %s1, 7
    %64 = vst.msk [vmem:[%s63] ss:$16 sm:$0x3] %vm62, %v61
    %s65 = scalar_lea.vmem %s1, 7
    %66 = vst.msk [vmem:[%s65] ss:$16 sm:$0xc] %vm62, %v61
    %v67 = vld [vmem:[#allocation0] sm:$0xf]
    %68 = vrot.lane.b32.xlu0 %v67, 120
    %v69 = vpop.permute.xlu0 %68
    %vm70 = vcmask 7168
    %s71 = scalar_lea.vmem %s1, 8
    %72 = vst.msk [vmem:[%s71] ss:$16 sm:$0x3] %vm70, %v69
    %s73 = scalar_lea.vmem %s1, 8
    %74 = vst.msk [vmem:[%s73] ss:$16 sm:$0xc] %vm70, %v69
    %v75 = vld [vmem:[#allocation0] sm:$0xf]
    %76 = vrot.lane.b32.xlu0 %v75, 119
    %v77 = vpop.permute.xlu0 %76
    %vm78 = vcmask 7168
    %s79 = scalar_lea.vmem %s1, 9
    %80 = vst.msk [vmem:[%s79] ss:$16 sm:$0x3] %vm78, %v77
    %s81 = scalar_lea.vmem %s1, 9
    %82 = vst.msk [vmem:[%s81] ss:$16 sm:$0xc] %vm78, %v77
    %v83 = vld [vmem:[#allocation0] sm:$0xf]
    %84 = vrot.lane.b32.xlu0 %v83, 118
    %v85 = vpop.permute.xlu0 %84
    %vm86 = vcmask 7168
    %s87 = scalar_lea.vmem %s1, 10
    %88 = vst.msk [vmem:[%s87] ss:$16 sm:$0x3] %vm86, %v85
    %s89 = scalar_lea.vmem %s1, 10
    %90 = vst.msk [vmem:[%s89] ss:$16 sm:$0xc] %vm86, %v85
    %v91 = vld [vmem:[#allocation0] sm:$0xf]
    %92 = vrot.lane.b32.xlu0 %v91, 117
    %v93 = vpop.permute.xlu0 %92
    %vm94 = vcmask 7168
    %s95 = scalar_lea.vmem %s1, 11
    %96 = vst.msk [vmem:[%s95] ss:$16 sm:$0x3] %vm94, %v93
    %s97 = scalar_lea.vmem %s1, 11
    %98 = vst.msk [vmem:[%s97] ss:$16 sm:$0xc] %vm94, %v93
    %v99 = vld [vmem:[#allocation0] sm:$0xf]
    %100 = vrot.lane.b32.xlu0 %v99, 116
    %v101 = vpop.permute.xlu0 %100
    %vm102 = vcmask 7168
    %s103 = scalar_lea.vmem %s1, 12
    %104 = vst.msk [vmem:[%s103] ss:$16 sm:$0x3] %vm102, %v101
    %s105 = scalar_lea.vmem %s1, 12
    %106 = vst.msk [vmem:[%s105] ss:$16 sm:$0xc] %vm102, %v101
    %v107 = vld [vmem:[#allocation0] sm:$0xf]
    %108 = vrot.lane.b32.xlu0 %v107, 115
    %v109 = vpop.permute.xlu0 %108
    %vm110 = vcmask 7168
    %s111 = scalar_lea.vmem %s1, 13
    %112 = vst.msk [vmem:[%s111] ss:$16 sm:$0x3] %vm110, %v109
    %s113 = scalar_lea.vmem %s1, 13
    %114 = vst.msk [vmem:[%s113] ss:$16 sm:$0xc] %vm110, %v109
    %v115 = vld [vmem:[#allocation0] sm:$0xf]
    %116 = vrot.lane.b32.xlu0 %v115, 114
    %v117 = vpop.permute.xlu0 %116
    %vm118 = vcmask 7168
    %s119 = scalar_lea.vmem %s1, 14
    %120 = vst.msk [vmem:[%s119] ss:$16 sm:$0x3] %vm118, %v117
    %s121 = scalar_lea.vmem %s1, 14
    %122 = vst.msk [vmem:[%s121] ss:$16 sm:$0xc] %vm118, %v117
    %v123 = vld [vmem:[#allocation0] sm:$0xf]
    %124 = vrot.lane.b32.xlu0 %v123, 113
    %v125 = vpop.permute.xlu0 %124
    %vm126 = vcmask 7168
    %s127 = scalar_lea.vmem %s1, 15
    %128 = vst.msk [vmem:[%s127] ss:$16 sm:$0x3] %vm126, %v125
    %s129 = scalar_lea.vmem %s1, 15
    %130 = vst.msk [vmem:[%s129] ss:$16 sm:$0xc] %vm126, %v125

// kernel: _lambda_.3
$region0: #{_lambda_.3}
  #allocation0 [shape = 'u32[]', space=smem, size = 0x4, offset = 0x4, fixed_abs, tag = 'smem constant byte address 0x4 - core index']
  #allocation1 [shape = 'u32[144,128]{1,0:T(1,128)}', space=vmem, size = 0x12000, scoped, tag = 'internal scratch']
  %s0 = inlined_call_operand.vmem [shape: bf16[2,32,82], index: 0, kind: input, shape index: {}]
  %s1 = inlined_call_operand.vmem [shape: bf16[64,32], index: 1, kind: input, shape index: {}]
  %s2 = inlined_call_operand.vmem [shape: f32[64,1], index: 2, kind: input, shape index: {}]
  %s3 = inlined_call_operand.vmem [shape: f32[1,82], index: 3, kind: input, shape index: {}]
  %s4 = inlined_call_operand.vmem [shape: bf16[64,256], index: 4, kind: input, shape index: {}]
  %s5 = inlined_call_operand.vmem [shape: f32[64,1], index: 5, kind: input, shape index: {}]
  %s6 = inlined_call_operand.vmem [shape: f32[2,64,72], index: 6, kind: output, shape index: {}]
  %s7 = sld [smem:[#allocation0]]
  $region57: #{_lambda_.3} parent=0
    _
  %s9 = ssub.s32 1, %s7
  %s10 = scalar_select 0, %s9, %s7
  loop: start=0, step=1, limit=4
  $region2: #{_lambda_.3} parent=0 // loop_pre_header
    _
  $region3: #{_lambda_.3} parent=0 // loop_header
    %s12 = sphi 0, %s16
    %p13 = scmp.ge.s32.totalorder %s12, 4
    %s22 = sphi 0, %s24
    %s25 = sphi 0, %s22
    %s26 = sphi 0, %s25
    %s42 = sphi 0, %s26
    %s46 = sphi 0, %s46
    %s48 = sphi 0, %s46
    %s49 = sphi 0, %s48
    %s63 = sphi 0, %s49
    %s67 = sphi 0, %s67
    %s69 = sphi 0, %s67
    %s70 = sphi 0, %s69
    %s84 = sphi 0, %s70
    %s88 = sphi 0, %s88
    %s90 = sphi 0, %s88
    %s91 = sphi 0, %s90
    %s105 = sphi 0, %s91
    %s109 = sphi 0, %s109
    %s111 = sphi 0, %s109
    %s112 = sphi 0, %s111
    %s126 = sphi 0, %s112
    %s130 = sphi 0, %s130
    %s132 = sphi 0, %s130
    %s133 = sphi 0, %s132
    %s147 = sphi 0, %s133
    %s153 = sphi 0, %s155
    %s156 = sphi 0, %s153
    %s157 = sphi 0, %s156
    %s173 = sphi 0, %s157
  $region4: #{_lambda_.3} parent=0 // loop_header_branch
    %15 = sbr.rel (%p13) target = $region8
  $region5: #{_lambda_.3} parent=0 // loop_body
    %s17 = ssub.s32 %s12, 1
    %s18 = ssub.s32 %s12, 2
    %s19 = sadd.s32 %s12, 1
    %s20 = ssub.s32 %s12, %s19
    %p21 = scmp.eq.s32.totalorder %s20, 0
    %s23 = sadd.s32 %s22, 1
    %s24 = scalar_select %p21, %s22, %s23
    %p27 = pneg %p21
    %p28 = scmp.eq.s32.totalorder %s12, 1
    %p29 = por %p27, %p28
    %p30 = scmp.ne.s32.totalorder %s22, %s25
    %p31 = scmp.eq.s32.totalorder %s12, 0
    %p32 = por %p30, %p31
    %p33 = scmp.ne.s32.totalorder %s22, %s25
    %p34 = scmp.eq.s32.totalorder %s17, 1
    %p35 = por %p33, %p34
    %p36 = scmp.ne.s32.totalorder %s25, %s26
    %p37 = scmp.eq.s32.totalorder %s17, 0
    %p38 = por %p36, %p37
    %p39 = scmp.ne.s32.totalorder %s25, %s26
    %p40 = scmp.eq.s32.totalorder %s18, 1
    %p41 = por %p39, %p40
    %p43 = scmp.ne.s32.totalorder %s26, %s42
    %p44 = scmp.eq.s32.totalorder %s18, 0
    %p45 = por %p43, %p44
    %s47 = sadd.s32 %s46, 1
    %p50 = scmp.eq.s32.totalorder %s12, 1
    %p51 = scmp.ne.s32.totalorder %s46, %s48
    %p52 = scmp.eq.s32.totalorder %s12, 0
    %p53 = por %p51, %p52
    %p54 = scmp.ne.s32.totalorder %s46, %s48
    %p55 = scmp.eq.s32.totalorder %s17, 1
    %p56 = por %p54, %p55
    %p57 = scmp.ne.s32.totalorder %s48, %s49
    %p58 = scmp.eq.s32.totalorder %s17, 0
    %p59 = por %p57, %p58
    %p60 = scmp.ne.s32.totalorder %s48, %s49
    %p61 = scmp.eq.s32.totalorder %s18, 1
    %p62 = por %p60, %p61
    %p64 = scmp.ne.s32.totalorder %s49, %s63
    %p65 = scmp.eq.s32.totalorder %s18, 0
    %p66 = por %p64, %p65
    %s68 = sadd.s32 %s67, 1
    %p71 = scmp.eq.s32.totalorder %s12, 1
    %p72 = scmp.ne.s32.totalorder %s67, %s69
    %p73 = scmp.eq.s32.totalorder %s12, 0
    %p74 = por %p72, %p73
    %p75 = scmp.ne.s32.totalorder %s67, %s69
    %p76 = scmp.eq.s32.totalorder %s17, 1
    %p77 = por %p75, %p76
    %p78 = scmp.ne.s32.totalorder %s69, %s70
    %p79 = scmp.eq.s32.totalorder %s17, 0
    %p80 = por %p78, %p79
    %p81 = scmp.ne.s32.totalorder %s69, %s70
    %p82 = scmp.eq.s32.totalorder %s18, 1
    %p83 = por %p81, %p82
    %p85 = scmp.ne.s32.totalorder %s70, %s84
    %p86 = scmp.eq.s32.totalorder %s18, 0
    %p87 = por %p85, %p86
    %s89 = sadd.s32 %s88, 1
    %p92 = scmp.eq.s32.totalorder %s12, 1
    %p93 = scmp.ne.s32.totalorder %s88, %s90
    %p94 = scmp.eq.s32.totalorder %s12, 0
    %p95 = por %p93, %p94
    %p96 = scmp.ne.s32.totalorder %s88, %s90
    %p97 = scmp.eq.s32.totalorder %s17, 1
    %p98 = por %p96, %p97
    %p99 = scmp.ne.s32.totalorder %s90, %s91
    %p100 = scmp.eq.s32.totalorder %s17, 0
    %p101 = por %p99, %p100
    %p102 = scmp.ne.s32.totalorder %s90, %s91
    %p103 = scmp.eq.s32.totalorder %s18, 1
    %p104 = por %p102, %p103
    %p106 = scmp.ne.s32.totalorder %s91, %s105
    %p107 = scmp.eq.s32.totalorder %s18, 0
    %p108 = por %p106, %p107
    %s110 = sadd.s32 %s109, 1
    %p113 = scmp.eq.s32.totalorder %s12, 1
    %p114 = scmp.ne.s32.totalorder %s109, %s111
    %p115 = scmp.eq.s32.totalorder %s12, 0
    %p116 = por %p114, %p115
    %p117 = scmp.ne.s32.totalorder %s109, %s111
    %p118 = scmp.eq.s32.totalorder %s17, 1
    %p119 = por %p117, %p118
    %p120 = scmp.ne.s32.totalorder %s111, %s112
    %p121 = scmp.eq.s32.totalorder %s17, 0
    %p122 = por %p120, %p121
    %p123 = scmp.ne.s32.totalorder %s111, %s112
    %p124 = scmp.eq.s32.totalorder %s18, 1
    %p125 = por %p123, %p124
    %p127 = scmp.ne.s32.totalorder %s112, %s126
    %p128 = scmp.eq.s32.totalorder %s18, 0
    %p129 = por %p127, %p128
    %s131 = sadd.s32 %s130, 1
    %p134 = scmp.eq.s32.totalorder %s12, 1
    %p135 = scmp.ne.s32.totalorder %s130, %s132
    %p136 = scmp.eq.s32.totalorder %s12, 0
    %p137 = por %p135, %p136
    %p138 = scmp.ne.s32.totalorder %s130, %s132
    %p139 = scmp.eq.s32.totalorder %s17, 1
    %p140 = por %p138, %p139
    %p141 = scmp.ne.s32.totalorder %s132, %s133
    %p142 = scmp.eq.s32.totalorder %s17, 0
    %p143 = por %p141, %p142
    %p144 = scmp.ne.s32.totalorder %s132, %s133
    %p145 = scmp.eq.s32.totalorder %s18, 1
    %p146 = por %p144, %p145
    %p148 = scmp.ne.s32.totalorder %s133, %s147
    %p149 = scmp.eq.s32.totalorder %s18, 0
    %p150 = por %p148, %p149
    %s151 = ssub.s32 %s12, %s19
    %p152 = scmp.eq.s32.totalorder %s151, 0
    %s154 = sadd.s32 %s153, 1
    %s155 = scalar_select %p152, %s153, %s154
    %p158 = pneg %p152
    %p159 = scmp.eq.s32.totalorder %s12, 1
    %p160 = por %p158, %p159
    %p161 = scmp.ne.s32.totalorder %s153, %s156
    %p162 = scmp.eq.s32.totalorder %s12, 0
    %p163 = por %p161, %p162
    %p164 = scmp.ne.s32.totalorder %s153, %s156
    %p165 = scmp.eq.s32.totalorder %s17, 1
    %p166 = por %p164, %p165
    %p167 = scmp.ne.s32.totalorder %s156, %s157
    %p168 = scmp.eq.s32.totalorder %s17, 0
    %p169 = por %p167, %p168
    %p170 = scmp.ne.s32.totalorder %s156, %s157
    %p171 = scmp.eq.s32.totalorder %s18, 1
    %p172 = por %p170, %p171
    %p174 = scmp.ne.s32.totalorder %s157, %s173
    %p175 = scmp.eq.s32.totalorder %s18, 0
    %p176 = por %p174, %p175
    %p177 = scmp.le.s32.totalorder 1, %s12
    %p178 = scmp.lt.s32.totalorder %s12, 3
    %p179 = pnand %p177, %p178
    %p180 = pneg %p179
    // Predicated region
    $region9: #{_lambda_.3} parent=5 // pred_check
      _
    $region10: #{_lambda_.3} parent=5 // pred_check_branch
      %182 = sbr.rel (%p179) target = $region12
    $region11: #{_lambda_.3} parent=5 // pred_region
      %s183 = ssub.s32 %s12, 1
      // Predicated region
      $region13: #{_lambda_.3} parent=11 // pred_check
        %p184 = pneg %p59
      $region14: #{_lambda_.3} parent=11 // pred_check_branch
        %186 = sbr.rel (%p184) target = $region16
      $region15: #{_lambda_.3} parent=11 // pred_region
        _
      $region16: #{_lambda_.3} parent=11 // pred_fallthru
        _
      // Predicated region
      $region17: #{_lambda_.3} parent=11 // pred_check
        %p187 = pneg %p80
      $region18: #{_lambda_.3} parent=11 // pred_check_branch
        %189 = sbr.rel (%p187) target = $region20
      $region19: #{_lambda_.3} parent=11 // pred_region
        _
      $region20: #{_lambda_.3} parent=11 // pred_fallthru
        _
      // Predicated region
      $region21: #{_lambda_.3} parent=11 // pred_check
        %p190 = pneg %p101
      $region22: #{_lambda_.3} parent=11 // pred_check_branch
        %192 = sbr.rel (%p190) target = $region24
      $region23: #{_lambda_.3} parent=11 // pred_region
        _
      $region24: #{_lambda_.3} parent=11 // pred_fallthru
        _
      // Predicated region
      $region25: #{_lambda_.3} parent=11 // pred_check
        %p193 = pneg %p122
      $region26: #{_lambda_.3} parent=11 // pred_check_branch
        %195 = sbr.rel (%p193) target = $region28
      $region27: #{_lambda_.3} parent=11 // pred_region
        _
      $region28: #{_lambda_.3} parent=11 // pred_fallthru
        _
      // Predicated region
      $region29: #{_lambda_.3} parent=11 // pred_check
        %p196 = pneg %p143
      $region30: #{_lambda_.3} parent=11 // pred_check_branch
        %198 = sbr.rel (%p196) target = $region32
      $region31: #{_lambda_.3} parent=11 // pred_region
        _
      $region32: #{_lambda_.3} parent=11 // pred_fallthru
        _
    $region12: #{_lambda_.3} parent=5 // pred_fallthru
      _
    %p199 = scmp.lt.s32.totalorder %s12, 2
    // Predicated region
    $region33: #{_lambda_.3} parent=5 // pred_check
      %p200 = pneg %p199
    $region34: #{_lambda_.3} parent=5 // pred_check_branch
      %202 = sbr.rel (%p200) target = $region36
    $region35: #{_lambda_.3} parent=5 // pred_region
      // Predicated region
      $region37: #{_lambda_.3} parent=35 // pred_check
        %p203 = pneg %p32
      $region38: #{_lambda_.3} parent=35 // pred_check_branch
        %205 = sbr.rel (%p203) target = $region40
      $region39: #{_lambda_.3} parent=35 // pred_region
        %p206 = scmp.lt.s32.totalorder %s12, 1
        %s207 = scalar_select %p206, %s12, 1
        %s208 = smul.addr %s207, 4
        %s209 = smul.addr %s208, 4
        %s210 = scalar_lea.vmem %s0, %s209
      $region40: #{_lambda_.3} parent=35 // pred_fallthru
        _
    $region36: #{_lambda_.3} parent=5 // pred_fallthru
      _
    %p211 = scmp.le.s32.totalorder 1, %s12
    %p212 = scmp.lt.s32.totalorder %s12, 3
    %p213 = pnand %p211, %p212
    %p214 = pneg %p213
    // Predicated region
    $region41: #{_lambda_.3} parent=5 // pred_check
      _
    $region42: #{_lambda_.3} parent=5 // pred_check_branch
      %216 = sbr.rel (%p213) target = $region44
    $region43: #{_lambda_.3} parent=5 // pred_region
      %s217 = ssub.s32 %s12, 1
      %p218 = scmp.lt.s32.totalorder %s17, 1
      %s219 = scalar_select %p218, %s17, 1
      %s220 = smul.addr %s219, 4
      %s221 = smul.addr %s220, 4
      %s222 = scalar_lea.vmem %s0, %s221
      %p223 = pneg %p38
      %p224 = pneg %p35
      %p225 = pneg %p59
      %p226 = pneg %p56
      %p227 = pneg %p80
      %p228 = pneg %p77
      %p229 = pneg %p101
      %p230 = pneg %p98
      %p231 = pneg %p122
      %p232 = pneg %p119
      %p233 = pneg %p143
      %p234 = pneg %p140
      %p235 = pneg %p169
      %p236 = pneg %p166
      %p237 = scmp.lt.s32.totalorder %s17, 1
      %s238 = scalar_select %p237, %s17, 1
      %s239 = smul.addr %s238, 8
      %s240 = smul.addr %s239, 8
      %s241 = scalar_lea.vmem %s6, %s240
      %p242 = scmp.lt.s32.totalorder %s17, 1
      %s243 = scalar_select %p242, %s17, 1
      %s244 = smul.addr %s243, 4
      %s245 = smul.addr %s244, 4
      %s246 = scalar_lea.vmem %s0, %s245
      %p247 = scmp.lt.s32.totalorder %s17, 1
      %s248 = scalar_select %p247, %s17, 1
      %s249 = smul.addr %s248, 8
      %s250 = smul.addr %s249, 8
      %s251 = scalar_lea.vmem %s6, %s250
      %v253 = vld [vmem:[%s1] sm:$0xf]
      %v254 = vld [vmem:[%s1 + $0x4] sm:$0xf]
      %v255 = vld [vmem:[%s1 + $0x8] sm:$0xf]
      %v256 = vld [vmem:[%s1 + $0xc] sm:$0xf]
      %v257 = vld [vmem:[%s1 + $0x10] sm:$0xf]
      %v258 = vld [vmem:[%s1 + $0x14] sm:$0xf]
      %v259 = vld [vmem:[%s1 + $0x18] sm:$0xf]
      %v260 = vld [vmem:[%s1 + $0x1c] sm:$0xf]
      %v261 = vld [vmem:[%s246] sm:$0xf]
      %v262 = vld [vmem:[%s246 + $0x4] sm:$0xf]
      %v263 = vld [vmem:[%s246 + $0x8] sm:$0xf]
      %v264 = vld [vmem:[%s246 + $0xc] sm:$0xf]
      %v265 = vld [vmem:[%s2] sm:$0xff]
      %v266 = vld [vmem:[%s2 + $0x8] sm:$0xff]
      %v267 = vld [vmem:[%s2 + $0x10] sm:$0xff]
      %v268 = vld [vmem:[%s2 + $0x18] sm:$0xff]
      %v269 = vld [vmem:[%s2 + $0x20] sm:$0xff]
      %v270 = vld [vmem:[%s2 + $0x28] sm:$0xff]
      %v271 = vld [vmem:[%s2 + $0x30] sm:$0xff]
      %v272 = vld [vmem:[%s2 + $0x38] sm:$0xff]
      %274 = vset.pattern.permute.xlu0 0
      %275 = vperm.xlu0 %274, %v265
      %v276 = vpop.permute.xlu0 %275
      %279 = vset.pattern.permute.xlu0 0
      %280 = vperm.xlu0 %279, %v266
      %v281 = vpop.permute.xlu0 %280
      %284 = vset.pattern.permute.xlu0 0
      %285 = vperm.xlu0 %284, %v267
      %v286 = vpop.permute.xlu0 %285
      %289 = vset.pattern.permute.xlu0 0
      %290 = vperm.xlu0 %289, %v268
      %v291 = vpop.permute.xlu0 %290
      %294 = vset.pattern.permute.xlu0 0
      %295 = vperm.xlu0 %294, %v269
      %v296 = vpop.permute.xlu0 %295
      %299 = vset.pattern.permute.xlu0 0
      %300 = vperm.xlu0 %299, %v270
      %v301 = vpop.permute.xlu0 %300
      %304 = vset.pattern.permute.xlu0 0
      %305 = vperm.xlu0 %304, %v271
      %v306 = vpop.permute.xlu0 %305
      %309 = vset.pattern.permute.xlu0 0
      %310 = vperm.xlu0 %309, %v272
      %v311 = vpop.permute.xlu0 %310
      %v321 = vunpack.c.l.b16 %v253
      %v322 = vunpack.c.l.b16 %v254
      %v323 = vunpack.c.l.b16 %v255
      %v324 = vunpack.c.l.b16 %v256
      %v325 = vunpack.c.l.b16 %v257
      %v326 = vunpack.c.l.b16 %v258
      %v327 = vunpack.c.l.b16 %v259
      %v328 = vunpack.c.l.b16 %v260
      %v329 = vpack.c.b16 %v322, %v321
      %v330 = vpack.c.b16 %v324, %v323
      %v331 = vpack.c.b16 %v326, %v325
      %v332 = vpack.c.b16 %v328, %v327
      %v337 = vunpack.c.l.b16 %v261
      %v338 = vunpack.c.l.b16 %v262
      %v339 = vunpack.c.l.b16 %v263
      %v340 = vunpack.c.l.b16 %v264
      %v341 = vpack.c.b16 %v338, %v337
      %v342 = vpack.c.b16 %v340, %v339
      %vm345 = vcmask 261120
      %v347 = vsel %vm345, %v329, 0
      %v350 = vsel %vm345, %v330, 0
      %v353 = vsel %vm345, %v331, 0
      %v356 = vsel %vm345, %v332, 0
      %358 = vmatprep.subr.bf16.mxu0 0
      %359 = vmatpush1.bf16.msra.mxu0 0
      %360 = vmatprep.subr.bf16.mxu0 0
      %361 = vmatpush1.bf16.msra.mxu0 0
      %362 = vmatprep.subr.bf16.mxu0 0
      %363 = vmatpush1.bf16.msra.mxu0 0
      %364 = vmatprep.subr.bf16.mxu0 0
      %365 = vmatpush1.bf16.msra.mxu0 0
      %366 = vmatprep.subr.bf16.mxu0 0
      %367 = vmatpush1.bf16.msra.mxu0 0
      %368 = vmatprep.subr.bf16.mxu0 0
      %369 = vmatpush1.bf16.msra.mxu0 0
      %370 = vmatprep.subr.bf16.mxu0 0
      %371 = vmatpush1.bf16.msra.mxu0 %v342
      %372 = vmatprep.subr.bf16.mxu0 0
      %373 = vmatpush1.bf16.msra.mxu0 %v341
      %374 = vmatprep.subr.bf16.mxu0 0
      %375 = vmatpush2.bf16.msra.mxu0 0
      %376 = vmatprep.subr.bf16.mxu0 0
      %377 = vmatpush2.bf16.msra.mxu0 0
      %378 = vmatprep.subr.bf16.mxu0 0
      %379 = vmatpush2.bf16.msra.mxu0 0
      %380 = vmatprep.subr.bf16.mxu0 0
      %381 = vmatpush2.bf16.msra.mxu0 0
      %382 = vmatprep.subr.bf16.mxu0 0
      %383 = vmatpush2.bf16.msra.mxu0 0
      %384 = vmatprep.subr.bf16.mxu0 0
      %385 = vmatpush2.bf16.msra.mxu0 0
      %386 = vmatprep.subr.bf16.mxu0 0
      %387 = vmatpush2.bf16.msra.mxu0 0
      %388 = vmatprep.subr.bf16.mxu0 0
      %389 = vmatpush2.bf16.msra.mxu0 0
      %390 = vmatprep.mubr.bf16.mxu0 0
      %391 = vmatmul.mubr.bf16.gmra.mxu0 %v347
      %v392 = vpop.f32.mrf.mxu0
      %v393 = vadd.f32 %v276, %v392
      %v394 = vpop.f32.mrf.mxu0
      %v395 = vpop.f32.mrf.mxu0
      %v396 = vadd.f32 %v281, %v395
      %v397 = vpop.f32.mrf.mxu0
      %398 = vmatprep.mubr.bf16.mxu0 0
      %399 = vmatmul.mubr.bf16.gmra.mxu0 %v350
      %v400 = vpop.f32.mrf.mxu0
      %v401 = vadd.f32 %v286, %v400
      %v402 = vpop.f32.mrf.mxu0
      %v403 = vpop.f32.mrf.mxu0
      %v404 = vadd.f32 %v291, %v403
      %v405 = vpop.f32.mrf.mxu0
      %406 = vmatprep.mubr.bf16.mxu0 0
      %407 = vmatmul.mubr.bf16.gmra.mxu0 %v353
      %v408 = vpop.f32.mrf.mxu0
      %v409 = vadd.f32 %v296, %v408
      %v410 = vpop.f32.mrf.mxu0
      %v411 = vpop.f32.mrf.mxu0
      %v412 = vadd.f32 %v301, %v411
      %v413 = vpop.f32.mrf.mxu0
      %414 = vmatprep.mubr.bf16.mxu0 0
      %415 = vmatmul.mubr.bf16.gmra.mxu0 %v356
      %v416 = vpop.f32.mrf.mxu0
      %v417 = vadd.f32 %v306, %v416
      %v418 = vpop.f32.mrf.mxu0
      %v419 = vpop.f32.mrf.mxu0
      %v420 = vadd.f32 %v311, %v419
      %v421 = vpop.f32.mrf.mxu0
      %422 = vdwg.mxu0
      %v423 = vmul.f32 %v393, 0.2
      %v424 = vmul.f32 %v396, 0.2
      %v425 = vmul.f32 %v401, 0.2
      %v426 = vmul.f32 %v404, 0.2
      %v427 = vmul.f32 %v409, 0.2
      %v428 = vmul.f32 %v412, 0.2
      %v429 = vmul.f32 %v417, 0.2
      %v430 = vmul.f32 %v420, 0.2
      %v431 = vmax.f32 %v393, %v423
      %v432 = vmax.f32 %v396, %v424
      %v433 = vmax.f32 %v401, %v425
      %v434 = vmax.f32 %v404, %v426
      %v435 = vmax.f32 %v409, %v427
      %v436 = vmax.f32 %v412, %v428
      %v437 = vmax.f32 %v417, %v429
      %v438 = vmax.f32 %v420, %v430
      %v439 = vld [vmem:[%s3] sm:$0x1]
      %v441 = vlaneseq
      %v442 = vshrl.u32 %v441, 7
      %v443 = vsub.s32 0, %v442
      %v444 = vrot.slane %v439, %v443
      %v446 = vmul.f32 %v431, %v444
      %v447 = vmul.f32 %v432, %v444
      %v448 = vmul.f32 %v433, %v444
      %v449 = vmul.f32 %v434, %v444
      %v450 = vmul.f32 %v435, %v444
      %v451 = vmul.f32 %v436, %v444
      %v452 = vmul.f32 %v437, %v444
      %v453 = vmul.f32 %v438, %v444
      %v454 = vpack.c.bf16 %v447, %v446
      %v455 = vpack.c.bf16 %v449, %v448
      %v456 = vpack.c.bf16 %v451, %v450
      %v457 = vpack.c.bf16 %v453, %v452
      %462 = vrot.lane.b32.xlu0 %v454, 127
      %v463 = vpop.permute.xlu0 %462
      %464 = vrot.lane.b32.xlu0 %v455, 127
      %v465 = vpop.permute.xlu0 %464
      %466 = vrot.lane.b32.xlu0 %v456, 127
      %v467 = vpop.permute.xlu0 %466
      %468 = vrot.lane.b32.xlu0 %v457, 127
      %v469 = vpop.permute.xlu0 %468
      %474 = vrot.lane.b32.xlu0 %v454, 119
      %v475 = vpop.permute.xlu0 %474
      %476 = vrot.lane.b32.xlu0 %v455, 119
      %v477 = vpop.permute.xlu0 %476
      %478 = vrot.lane.b32.xlu0 %v456, 119
      %v479 = vpop.permute.xlu0 %478
      %480 = vrot.lane.b32.xlu0 %v457, 119
      %v481 = vpop.permute.xlu0 %480
      %486 = vrot.lane.b32.xlu0 %v454, 118
      %v487 = vpop.permute.xlu0 %486
      %488 = vrot.lane.b32.xlu0 %v455, 118
      %v489 = vpop.permute.xlu0 %488
      %490 = vrot.lane.b32.xlu0 %v456, 118
      %v491 = vpop.permute.xlu0 %490
      %492 = vrot.lane.b32.xlu0 %v457, 118
      %v493 = vpop.permute.xlu0 %492
      %v498 = vld [vmem:[%s4] sm:$0xff]
      %v499 = vld [vmem:[%s4 + $0x8] sm:$0xff]
      %v500 = vld [vmem:[%s4 + $0x10] sm:$0xff]
      %v501 = vld [vmem:[%s4 + $0x18] sm:$0xff]
      %v502 = vld [vmem:[%s4 + $0x20] sm:$0xff]
      %v503 = vld [vmem:[%s4 + $0x28] sm:$0xff]
      %v504 = vld [vmem:[%s4 + $0x30] sm:$0xff]
      %v505 = vld [vmem:[%s4 + $0x38] sm:$0xff]
      %v506 = vld [vmem:[%s5] sm:$0xff]
      %v507 = vld [vmem:[%s5 + $0x8] sm:$0xff]
      %v508 = vld [vmem:[%s5 + $0x10] sm:$0xff]
      %v509 = vld [vmem:[%s5 + $0x18] sm:$0xff]
      %v510 = vld [vmem:[%s5 + $0x20] sm:$0xff]
      %v511 = vld [vmem:[%s5 + $0x28] sm:$0xff]
      %v512 = vld [vmem:[%s5 + $0x30] sm:$0xff]
      %v513 = vld [vmem:[%s5 + $0x38] sm:$0xff]
      %515 = vset.pattern.permute.xlu0 0
      %516 = vperm.xlu0 %515, %v506
      %v517 = vpop.permute.xlu0 %516
      %520 = vset.pattern.permute.xlu0 0
      %521 = vperm.xlu0 %520, %v507
      %v522 = vpop.permute.xlu0 %521
      %525 = vset.pattern.permute.xlu0 0
      %526 = vperm.xlu0 %525, %v508
      %v527 = vpop.permute.xlu0 %526
      %530 = vset.pattern.permute.xlu0 0
      %531 = vperm.xlu0 %530, %v509
      %v532 = vpop.permute.xlu0 %531
      %535 = vset.pattern.permute.xlu0 0
      %536 = vperm.xlu0 %535, %v510
      %v537 = vpop.permute.xlu0 %536
      %540 = vset.pattern.permute.xlu0 0
      %541 = vperm.xlu0 %540, %v511
      %v542 = vpop.permute.xlu0 %541
      %545 = vset.pattern.permute.xlu0 0
      %546 = vperm.xlu0 %545, %v512
      %v547 = vpop.permute.xlu0 %546
      %550 = vset.pattern.permute.xlu0 0
      %551 = vperm.xlu0 %550, %v513
      %v552 = vpop.permute.xlu0 %551
      %v562 = vunpack.c.l.b16 %v498
      %v563 = vunpack.c.h.b16 %v498
      %v564 = vunpack.c.l.b16 %v499
      %v565 = vunpack.c.h.b16 %v499
      %v566 = vunpack.c.l.b16 %v500
      %v567 = vunpack.c.h.b16 %v500
      %v568 = vunpack.c.l.b16 %v501
      %v569 = vunpack.c.h.b16 %v501
      %v570 = vunpack.c.l.b16 %v502
      %v571 = vunpack.c.h.b16 %v502
      %v572 = vunpack.c.l.b16 %v503
      %v573 = vunpack.c.h.b16 %v503
      %v574 = vunpack.c.l.b16 %v504
      %v575 = vunpack.c.h.b16 %v504
      %v576 = vunpack.c.l.b16 %v505
      %v577 = vunpack.c.h.b16 %v505
      %v578 = vpack.c.b16 %v564, %v562
      %v579 = vpack.c.b16 %v565, %v563
      %v580 = vpack.c.b16 %v568, %v566
      %v581 = vpack.c.b16 %v569, %v567
      %v582 = vpack.c.b16 %v572, %v570
      %v583 = vpack.c.b16 %v573, %v571
      %v584 = vpack.c.b16 %v576, %v574
      %v585 = vpack.c.b16 %v577, %v575
      %594 = vmatprep.subr.bf16.mxu0 0
      %595 = vmatpush1.bf16.msra.mxu0 %v469
      %596 = vmatprep.subr.bf16.mxu0 0
      %597 = vmatpush1.bf16.msra.mxu0 %v467
      %598 = vmatprep.subr.bf16.mxu0 0
      %599 = vmatpush1.bf16.msra.mxu0 %v465
      %600 = vmatprep.subr.bf16.mxu0 0
      %601 = vmatpush1.bf16.msra.mxu0 %v463
      %602 = vmatprep.subr.bf16.mxu0 0
      %603 = vmatpush1.bf16.msra.mxu0 %v457
      %604 = vmatprep.subr.bf16.mxu0 0
      %605 = vmatpush1.bf16.msra.mxu0 %v456
      %606 = vmatprep.subr.bf16.mxu0 0
      %607 = vmatpush1.bf16.msra.mxu0 %v455
      %608 = vmatprep.subr.bf16.mxu0 0
      %609 = vmatpush1.bf16.msra.mxu0 %v454
      %610 = vmatprep.subr.bf16.mxu0 0
      %611 = vmatpush2.bf16.msra.mxu0 %v493
      %612 = vmatprep.subr.bf16.mxu0 0
      %613 = vmatpush2.bf16.msra.mxu0 %v491
      %614 = vmatprep.subr.bf16.mxu0 0
      %615 = vmatpush2.bf16.msra.mxu0 %v489
      %616 = vmatprep.subr.bf16.mxu0 0
      %617 = vmatpush2.bf16.msra.mxu0 %v487
      %618 = vmatprep.subr.bf16.mxu0 0
      %619 = vmatpush2.bf16.msra.mxu0 %v481
      %620 = vmatprep.subr.bf16.mxu0 0
      %621 = vmatpush2.bf16.msra.mxu0 %v479
      %622 = vmatprep.subr.bf16.mxu0 0
      %623 = vmatpush2.bf16.msra.mxu0 %v477
      %624 = vmatprep.subr.bf16.mxu0 0
      %625 = vmatpush2.bf16.msra.mxu0 %v475
      %626 = vmatprep.mubr.bf16.mxu0 %v579
      %627 = vmatmul.mubr.bf16.gmra.mxu0 %v578
      %v628 = vpop.f32.mrf.mxu0
      %v629 = vadd.f32 %v517, %v628
      %v630 = vpop.f32.mrf.mxu0
      %v631 = vpop.f32.mrf.mxu0
      %v632 = vadd.f32 %v522, %v631
      %v633 = vpop.f32.mrf.mxu0
      %634 = vmatprep.mubr.bf16.mxu0 %v581
      %635 = vmatmul.mubr.bf16.gmra.mxu0 %v580
      %v636 = vpop.f32.mrf.mxu0
      %v637 = vadd.f32 %v527, %v636
      %v638 = vpop.f32.mrf.mxu0
      %v639 = vpop.f32.mrf.mxu0
      %v640 = vadd.f32 %v532, %v639
      %v641 = vpop.f32.mrf.mxu0
      %642 = vmatprep.mubr.bf16.mxu0 %v583
      %643 = vmatmul.mubr.bf16.gmra.mxu0 %v582
      %v644 = vpop.f32.mrf.mxu0
      %v645 = vadd.f32 %v537, %v644
      %v646 = vpop.f32.mrf.mxu0
      %v647 = vpop.f32.mrf.mxu0
      %v648 = vadd.f32 %v542, %v647
      %v649 = vpop.f32.mrf.mxu0
      %650 = vmatprep.mubr.bf16.mxu0 %v585
      %651 = vmatmul.mubr.bf16.gmra.mxu0 %v584
      %v652 = vpop.f32.mrf.mxu0
      %v653 = vadd.f32 %v547, %v652
      %v654 = vpop.f32.mrf.mxu0
      %v655 = vpop.f32.mrf.mxu0
      %v656 = vadd.f32 %v552, %v655
      %v657 = vpop.f32.mrf.mxu0
      %658 = vdwg.mxu0
      %vm659 = vcmask 588800
      %660 = vst.msk [vmem:[%s251] sm:$0xff] %vm659, %v629
      %661 = vst.msk [vmem:[%s251 + $0x8] sm:$0xff] %vm659, %v632
      %662 = vst.msk [vmem:[%s251 + $0x10] sm:$0xff] %vm659, %v637
      %663 = vst.msk [vmem:[%s251 + $0x18] sm:$0xff] %vm659, %v640
      %664 = vst.msk [vmem:[%s251 + $0x20] sm:$0xff] %vm659, %v645
      %665 = vst.msk [vmem:[%s251 + $0x28] sm:$0xff] %vm659, %v648
      %666 = vst.msk [vmem:[%s251 + $0x30] sm:$0xff] %vm659, %v653
      %667 = vst.msk [vmem:[%s251 + $0x38] sm:$0xff] %vm659, %v656
      %p668 = scmp.lt.s32.totalorder %s17, 1
      %s669 = scalar_select %p668, %s17, 1
      %s670 = smul.addr %s669, 8
      %s671 = smul.addr %s670, 8
      %s672 = scalar_lea.vmem %s6, %s671
      // Predicated region
      $region45: #{_lambda_.3} parent=43 // pred_check
        %p673 = pneg %p166
      $region46: #{_lambda_.3} parent=43 // pred_check_branch
        %675 = sbr.rel (%p673) target = $region48
      $region47: #{_lambda_.3} parent=43 // pred_region
        _
      $region48: #{_lambda_.3} parent=43 // pred_fallthru
        _
    $region44: #{_lambda_.3} parent=5 // pred_fallthru
      _
    %p676 = scmp.le.s32.totalorder 2, %s12
    // Predicated region
    $region49: #{_lambda_.3} parent=5 // pred_check
      %p677 = pneg %p676
    $region50: #{_lambda_.3} parent=5 // pred_check_branch
      %679 = sbr.rel (%p677) target = $region52
    $region51: #{_lambda_.3} parent=5 // pred_region
      %s680 = ssub.s32 %s12, 2
      // Predicated region
      $region53: #{_lambda_.3} parent=51 // pred_check
        %p681 = pneg %p172
      $region54: #{_lambda_.3} parent=51 // pred_check_branch
        %683 = sbr.rel (%p681) target = $region56
      $region55: #{_lambda_.3} parent=51 // pred_region
        %p684 = scmp.lt.s32.totalorder %s18, 1
        %s685 = scalar_select %p684, %s18, 1
        %s686 = smul.addr %s685, 8
        %s687 = smul.addr %s686, 8
        %s688 = scalar_lea.vmem %s6, %s687
      $region56: #{_lambda_.3} parent=51 // pred_fallthru
        _
    $region52: #{_lambda_.3} parent=5 // pred_fallthru
      _
  $region6: #{_lambda_.3} parent=0 // loop_footer
    %s16 = sadd.s32 1, %s12
  $region7: #{_lambda_.3} parent=0 // loop_footer_branch
    %11 = sbr.rel target = $region3
  $region8: #{_lambda_.3} parent=0 // loop_exit
    _

// kernel: _lambda_.4
$region0: #{_lambda_.4}
  #allocation0 [shape = 'u32[]', space=smem, size = 0x4, offset = 0x4, fixed_abs, tag = 'smem constant byte address 0x4 - core index']
  #allocation1 [shape = 'u32[144,128]{1,0:T(1,128)}', space=vmem, size = 0x12000, scoped, tag = 'internal scratch']
  %s0 = inlined_call_operand.vmem [shape: f32[2,16,4], index: 0, kind: input, shape index: {}]
  %s1 = inlined_call_operand.vmem [shape: f32[16,4], index: 1, kind: input, shape index: {}]
  %s2 = inlined_call_operand.vmem [shape: f32[4,16], index: 2, kind: input, shape index: {}]
  %s3 = inlined_call_operand.hbm [shape: f32[2,64,16], index: 3, kind: output, shape index: {}]
  %s4 = sld [smem:[#allocation0]]
  $region45: #{_lambda_.4} parent=0
    _
  %s6 = ssub.s32 1, %s4
  %s7 = scalar_select 0, %s6, %s4
  $region1: #{_lambda_.4} parent=0
    #allocation2 [shape = 'u8[32768]{0}', space=vmem, size = 0x8000, scoped, tag = 'output window, operand 0']
    #allocation3 [shape = 's32[2]{0}', space=sflag, size = 0x8, scoped, tag = 'scoped memory for _lambda_.4']
    %8 = vsyncpa [#allocation3], 0
    %s9 = scalar_lea.sflag [#allocation3], 1
    %10 = vsyncpa %s9, 0
    loop: start=0, step=1, limit=6
    $region2: #{_lambda_.4} parent=1 // loop_pre_header
      _
    $region3: #{_lambda_.4} parent=1 // loop_header
      %s12 = sphi 0, %s16
      %p13 = scmp.ge.s32.totalorder %s12, 6
      %s19 = sphi 0, %s31
      %s20 = sphi 0, %s27
      %s21 = sphi 0, %s19
      %s22 = sphi 0, %s20
      %s23 = sphi 0, %s21
      %s24 = sphi 0, %s22
      %s36 = sphi 0, %s38
      %s39 = sphi 0, %s36
      %s40 = sphi 0, %s39
      %s56 = sphi 0, %s40
      %s60 = sphi 0, %s60
      %s62 = sphi 0, %s60
      %s63 = sphi 0, %s62
      %s77 = sphi 0, %s63
      %s81 = sphi 0, %s81
      %s83 = sphi 0, %s81
      %s84 = sphi 0, %s83
      %s98 = sphi 0, %s84
      %s106 = sphi 0, %s108
      %s109 = sphi 0, %s106
      %s110 = sphi 0, %s109
      %s126 = sphi 0, %s110
    $region4: #{_lambda_.4} parent=1 // loop_header_branch
      %15 = sbr.rel (%p13) target = $region8
    $region5: #{_lambda_.4} parent=1 // loop_body
      %s17 = ssub.s32 %s12, 1
      %s18 = ssub.s32 %s12, 2
      %s25 = sadd.s32 1, %s20
      %p26 = scmp.ge.s32.totalorder %s25, 2
      %s27 = scalar_select %p26, 0, %s25
      %s28 = sadd.s32 1, %s19
      %s29 = scalar_select %p26, %s28, %s19
      %p30 = scmp.ge.s32.totalorder %s29, 2
      %s31 = scalar_select %p30, 0, %s29
      %s32 = ssub.s32 %s19, %s31
      %s33 = ssub.s32 %s20, %s27
      %s34 = sor.u32 %s32, %s33
      %p35 = scmp.eq.s32.totalorder %s34, 0
      %s37 = sadd.s32 %s36, 1
      %s38 = scalar_select %p35, %s36, %s37
      %p41 = pneg %p35
      %p42 = scmp.eq.s32.totalorder %s12, 3
      %p43 = por %p41, %p42
      %p44 = scmp.ne.s32.totalorder %s36, %s39
      %p45 = scmp.eq.s32.totalorder %s12, 0
      %p46 = por %p44, %p45
      %p47 = scmp.ne.s32.totalorder %s36, %s39
      %p48 = scmp.eq.s32.totalorder %s17, 3
      %p49 = por %p47, %p48
      %p50 = scmp.ne.s32.totalorder %s39, %s40
      %p51 = scmp.eq.s32.totalorder %s17, 0
      %p52 = por %p50, %p51
      %p53 = scmp.ne.s32.totalorder %s39, %s40
      %p54 = scmp.eq.s32.totalorder %s18, 3
      %p55 = por %p53, %p54
      %p57 = scmp.ne.s32.totalorder %s40, %s56
      %p58 = scmp.eq.s32.totalorder %s18, 0
      %p59 = por %p57, %p58
      %s61 = sadd.s32 %s60, 1
      %p64 = scmp.eq.s32.totalorder %s12, 3
      %p65 = scmp.ne.s32.totalorder %s60, %s62
      %p66 = scmp.eq.s32.totalorder %s12, 0
      %p67 = por %p65, %p66
      %p68 = scmp.ne.s32.totalorder %s60, %s62
      %p69 = scmp.eq.s32.totalorder %s17, 3
      %p70 = por %p68, %p69
      %p71 = scmp.ne.s32.totalorder %s62, %s63
      %p72 = scmp.eq.s32.totalorder %s17, 0
      %p73 = por %p71, %p72
      %p74 = scmp.ne.s32.totalorder %s62, %s63
      %p75 = scmp.eq.s32.totalorder %s18, 3
      %p76 = por %p74, %p75
      %p78 = scmp.ne.s32.totalorder %s63, %s77
      %p79 = scmp.eq.s32.totalorder %s18, 0
      %p80 = por %p78, %p79
      %s82 = sadd.s32 %s81, 1
      %p85 = scmp.eq.s32.totalorder %s12, 3
      %p86 = scmp.ne.s32.totalorder %s81, %s83
      %p87 = scmp.eq.s32.totalorder %s12, 0
      %p88 = por %p86, %p87
      %p89 = scmp.ne.s32.totalorder %s81, %s83
      %p90 = scmp.eq.s32.totalorder %s17, 3
      %p91 = por %p89, %p90
      %p92 = scmp.ne.s32.totalorder %s83, %s84
      %p93 = scmp.eq.s32.totalorder %s17, 0
      %p94 = por %p92, %p93
      %p95 = scmp.ne.s32.totalorder %s83, %s84
      %p96 = scmp.eq.s32.totalorder %s18, 3
      %p97 = por %p95, %p96
      %p99 = scmp.ne.s32.totalorder %s84, %s98
      %p100 = scmp.eq.s32.totalorder %s18, 0
      %p101 = por %p99, %p100
      %s102 = ssub.s32 %s19, %s31
      %s103 = ssub.s32 %s20, %s27
      %s104 = sor.u32 %s102, %s103
      %p105 = scmp.eq.s32.totalorder %s104, 0
      %s107 = sadd.s32 %s106, 1
      %s108 = scalar_select %p105, %s106, %s107
      %p111 = pneg %p105
      %p112 = scmp.eq.s32.totalorder %s12, 3
      %p113 = por %p111, %p112
      %p114 = scmp.ne.s32.totalorder %s106, %s109
      %p115 = scmp.eq.s32.totalorder %s12, 0
      %p116 = por %p114, %p115
      %p117 = scmp.ne.s32.totalorder %s106, %s109
      %p118 = scmp.eq.s32.totalorder %s17, 3
      %p119 = por %p117, %p118
      %p120 = scmp.ne.s32.totalorder %s109, %s110
      %p121 = scmp.eq.s32.totalorder %s17, 0
      %p122 = por %p120, %p121
      %p123 = scmp.ne.s32.totalorder %s109, %s110
      %p124 = scmp.eq.s32.totalorder %s18, 3
      %p125 = por %p123, %p124
      %p127 = scmp.ne.s32.totalorder %s110, %s126
      %p128 = scmp.eq.s32.totalorder %s18, 0
      %p129 = por %p127, %p128
      %p130 = scmp.le.s32.totalorder 1, %s12
      %p131 = scmp.lt.s32.totalorder %s12, 5
      %p132 = pnand %p130, %p131
      %p133 = pneg %p132
      // Predicated region
      $region9: #{_lambda_.4} parent=5 // pred_check
        _
      $region10: #{_lambda_.4} parent=5 // pred_check_branch
        %135 = sbr.rel (%p132) target = $region12
      $region11: #{_lambda_.4} parent=5 // pred_region
        %s136 = ssub.s32 %s12, 1
        // Predicated region
        $region13: #{_lambda_.4} parent=11 // pred_check
          %p137 = pneg %p73
        $region14: #{_lambda_.4} parent=11 // pred_check_branch
          %139 = sbr.rel (%p137) target = $region16
        $region15: #{_lambda_.4} parent=11 // pred_region
          _
        $region16: #{_lambda_.4} parent=11 // pred_fallthru
          _
        // Predicated region
        $region17: #{_lambda_.4} parent=11 // pred_check
          %p140 = pneg %p94
        $region18: #{_lambda_.4} parent=11 // pred_check_branch
          %142 = sbr.rel (%p140) target = $region20
        $region19: #{_lambda_.4} parent=11 // pred_region
          _
        $region20: #{_lambda_.4} parent=11 // pred_fallthru
          _
      $region12: #{_lambda_.4} parent=5 // pred_fallthru
        _
      %p143 = scmp.lt.s32.totalorder %s12, 4
      // Predicated region
      $region21: #{_lambda_.4} parent=5 // pred_check
        %p144 = pneg %p143
      $region22: #{_lambda_.4} parent=5 // pred_check_branch
        %146 = sbr.rel (%p144) target = $region24
      $region23: #{_lambda_.4} parent=5 // pred_region
        // Predicated region
        $region25: #{_lambda_.4} parent=23 // pred_check
          %p147 = pneg %p46
        $region26: #{_lambda_.4} parent=23 // pred_check_branch
          %149 = sbr.rel (%p147) target = $region28
        $region27: #{_lambda_.4} parent=23 // pred_region
          %p150 = scmp.lt.s32.totalorder %s19, 1
          %s151 = scalar_select %p150, %s19, 1
          %p152 = scmp.lt.s32.totalorder %s20, 1
          %s153 = scalar_select %p152, %s20, 1
          %s154 = smul.addr %s151, 2
          %s155 = sadd.s32 %s153, %s154
          %s156 = smul.addr %s155, 8
          %s157 = scalar_lea.vmem %s0, %s156
        $region28: #{_lambda_.4} parent=23 // pred_fallthru
          _
      $region24: #{_lambda_.4} parent=5 // pred_fallthru
        _
      %p158 = scmp.le.s32.totalorder 1, %s12
      %p159 = scmp.lt.s32.totalorder %s12, 5
      %p160 = pnand %p158, %p159
      %p161 = pneg %p160
      // Predicated region
      $region29: #{_lambda_.4} parent=5 // pred_check
        _
      $region30: #{_lambda_.4} parent=5 // pred_check_branch
        %163 = sbr.rel (%p160) target = $region32
      $region31: #{_lambda_.4} parent=5 // pred_region
        %s164 = ssub.s32 %s12, 1
        %p165 = scmp.lt.s32.totalorder %s21, 1
        %s166 = scalar_select %p165, %s21, 1
        %p167 = scmp.lt.s32.totalorder %s22, 1
        %s168 = scalar_select %p167, %s22, 1
        %s169 = smul.addr %s166, 2
        %s170 = sadd.s32 %s168, %s169
        %s171 = smul.addr %s170, 8
        %s172 = scalar_lea.vmem %s0, %s171
        %p173 = pneg %p52
        %p174 = pneg %p49
        %p175 = pneg %p73
        %p176 = pneg %p70
        %p177 = pneg %p94
        %p178 = pneg %p91
        %p179 = pneg %p122
        %p180 = pneg %p119
        %s181 = sand.u32 %s109, 1
        %s182 = scalar_lea.sflag [#allocation3], %s181
        %s183 = sand.u32 %s109, 1
        %s184 = smul.addr %s183, 32
        %s185 = scalar_lea.vmem [#allocation2], %s184
        %p186 = scmp.lt.s32.totalorder %s21, 1
        %s187 = scalar_select %p186, %s21, 1
        %p188 = scmp.lt.s32.totalorder %s22, 1
        %s189 = scalar_select %p188, %s22, 1
        %s190 = smul.addr %s187, 2
        %s191 = sadd.s32 %s189, %s190
        %s192 = smul.addr %s191, 8
        %s193 = scalar_lea.vmem %s0, %s192
        %s194 = smul.u32 4, %s22
        %v195 = vld [vmem:[%s193] sm:$0xff]
        %v196 = vld [vmem:[%s2] sm:$0xf]
        %vm197 = vcmask 31744
        %v199 = vsel %vm197, %v195, 0
        %vm201 = vcmask 1043456
        %v203 = vsel %vm201, %v196, 0
        %205 = vmatprep.subr.mxu0 0.0
        %206 = vmatpush1.msra.mxu0 0.0
        %207 = vmatprep.subr.mxu0 0.0
        %208 = vmatpush1.msra.mxu0 0.0
        %209 = vmatprep.subr.mxu0 0.0
        %210 = vmatpush1.msra.mxu0 0.0
        %211 = vmatprep.subr.mxu0 0.0
        %212 = vmatpush1.msra.mxu0 0.0
        %213 = vmatprep.subr.mxu0 0.0
        %214 = vmatpush1.msra.mxu0 0.0
        %215 = vmatprep.subr.mxu0 0.0
        %216 = vmatpush1.msra.mxu0 0.0
        %217 = vmatprep.subr.mxu0 0.0
        %218 = vmatpush1.msra.mxu0 0.0
        %219 = vmatprep.subr.mxu0 0.0
        %220 = vmatpush1.msra.mxu0 0.0
        %221 = vmatprep.subr.mxu0 0.0
        %222 = vmatpush1.msra.mxu0 0.0
        %223 = vmatprep.subr.mxu0 0.0
        %224 = vmatpush1.msra.mxu0 0.0
        %225 = vmatprep.subr.mxu0 0.0
        %226 = vmatpush1.msra.mxu0 0.0
        %227 = vmatprep.subr.mxu0 0.0
        %228 = vmatpush1.msra.mxu0 0.0
        %229 = vmatprep.subr.mxu0 0.0
        %230 = vmatpush1.msra.mxu0 0.0
        %231 = vmatprep.subr.mxu0 0.0
        %232 = vmatpush1.msra.mxu0 0.0
        %233 = vmatprep.subr.mxu0 0.0
        %234 = vmatpush1.msra.mxu0 0.0
        %235 = vmatprep.subr.mxu0 0.0
        %236 = vmatpush1.msra.mxu0 %v203
        %237 = vmatprep.subr.mxu0 0.0
        %238 = vmatpush2.msra.mxu0 0.0
        %239 = vmatprep.subr.mxu0 0.0
        %240 = vmatpush2.msra.mxu0 0.0
        %241 = vmatprep.subr.mxu0 0.0
        %242 = vmatpush2.msra.mxu0 0.0
        %243 = vmatprep.subr.mxu0 0.0
        %244 = vmatpush2.msra.mxu0 0.0
        %245 = vmatprep.subr.mxu0 0.0
        %246 = vmatpush2.msra.mxu0 0.0
        %247 = vmatprep.subr.mxu0 0.0
        %248 = vmatpush2.msra.mxu0 0.0
        %249 = vmatprep.subr.mxu0 0.0
        %250 = vmatpush2.msra.mxu0 0.0
        %251 = vmatprep.subr.mxu0 0.0
        %252 = vmatpush2.msra.mxu0 0.0
        %253 = vmatprep.subr.mxu0 0.0
        %254 = vmatpush2.msra.mxu0 0.0
        %255 = vmatprep.subr.mxu0 0.0
        %256 = vmatpush2.msra.mxu0 0.0
        %257 = vmatprep.subr.mxu0 0.0
        %258 = vmatpush2.msra.mxu0 0.0
        %259 = vmatprep.subr.mxu0 0.0
        %260 = vmatpush2.msra.mxu0 0.0
        %261 = vmatprep.subr.mxu0 0.0
        %262 = vmatpush2.msra.mxu0 0.0
        %263 = vmatprep.subr.mxu0 0.0
        %264 = vmatpush2.msra.mxu0 0.0
        %265 = vmatprep.subr.mxu0 0.0
        %266 = vmatpush2.msra.mxu0 0.0
        %267 = vmatprep.subr.mxu0 0.0
        %268 = vmatpush2.msra.mxu0 0.0
        %269 = vmatprep.mubr.f32.mxu0 0.0
        %270 = vmatmul.mubr.f32.gmra.mxu0 %v199
        %v271 = vpop.f32.mrf.mxu0
        %v272 = vadd.f32 0.0, %v271
        %v273 = vpop.f32.mrf.mxu0
        %274 = vdwg.mxu0
        %v275 = vld [vmem:[%s1] sm:$0xff]
        %v276 = vld [vmem:[%s1 + $0x8] sm:$0xff]
        %v278 = vsel %vm197, %v275, 0
        %v281 = vsel %vm197, %v276, 0
        %v284 = vsel %vm201, %v272, 0
        %286 = vmatprep.subr.mxu0 0.0
        %287 = vmatpush1.msra.mxu0 0.0
        %288 = vmatprep.subr.mxu0 0.0
        %289 = vmatpush1.msra.mxu0 0.0
        %290 = vmatprep.subr.mxu0 0.0
        %291 = vmatpush1.msra.mxu0 0.0
        %292 = vmatprep.subr.mxu0 0.0
        %293 = vmatpush1.msra.mxu0 0.0
        %294 = vmatprep.subr.mxu0 0.0
        %295 = vmatpush1.msra.mxu0 0.0
        %296 = vmatprep.subr.mxu0 0.0
        %297 = vmatpush1.msra.mxu0 0.0
        %298 = vmatprep.subr.mxu0 0.0
        %299 = vmatpush1.msra.mxu0 0.0
        %300 = vmatprep.subr.mxu0 0.0
        %301 = vmatpush1.msra.mxu0 0.0
        %302 = vmatprep.subr.mxu0 0.0
        %303 = vmatpush1.msra.mxu0 0.0
        %304 = vmatprep.subr.mxu0 0.0
        %305 = vmatpush1.msra.mxu0 0.0
        %306 = vmatprep.subr.mxu0 0.0
        %307 = vmatpush1.msra.mxu0 0.0
        %308 = vmatprep.subr.mxu0 0.0
        %309 = vmatpush1.msra.mxu0 0.0
        %310 = vmatprep.subr.mxu0 0.0
        %311 = vmatpush1.msra.mxu0 0.0
        %312 = vmatprep.subr.mxu0 0.0
        %313 = vmatpush1.msra.mxu0 0.0
        %314 = vmatprep.subr.mxu0 0.0
        %315 = vmatpush1.msra.mxu0 0.0
        %316 = vmatprep.subr.mxu0 0.0
        %317 = vmatpush1.msra.mxu0 %v284
        %318 = vmatprep.subr.mxu0 0.0
        %319 = vmatpush2.msra.mxu0 0.0
        %320 = vmatprep.subr.mxu0 0.0
        %321 = vmatpush2.msra.mxu0 0.0
        %322 = vmatprep.subr.mxu0 0.0
        %323 = vmatpush2.msra.mxu0 0.0
        %324 = vmatprep.subr.mxu0 0.0
        %325 = vmatpush2.msra.mxu0 0.0
        %326 = vmatprep.subr.mxu0 0.0
        %327 = vmatpush2.msra.mxu0 0.0
        %328 = vmatprep.subr.mxu0 0.0
        %329 = vmatpush2.msra.mxu0 0.0
        %330 = vmatprep.subr.mxu0 0.0
        %331 = vmatpush2.msra.mxu0 0.0
        %332 = vmatprep.subr.mxu0 0.0
        %333 = vmatpush2.msra.mxu0 0.0
        %334 = vmatprep.subr.mxu0 0.0
        %335 = vmatpush2.msra.mxu0 0.0
        %336 = vmatprep.subr.mxu0 0.0
        %337 = vmatpush2.msra.mxu0 0.0
        %338 = vmatprep.subr.mxu0 0.0
        %339 = vmatpush2.msra.mxu0 0.0
        %340 = vmatprep.subr.mxu0 0.0
        %341 = vmatpush2.msra.mxu0 0.0
        %342 = vmatprep.subr.mxu0 0.0
        %343 = vmatpush2.msra.mxu0 0.0
        %344 = vmatprep.subr.mxu0 0.0
        %345 = vmatpush2.msra.mxu0 0.0
        %346 = vmatprep.subr.mxu0 0.0
        %347 = vmatpush2.msra.mxu0 0.0
        %348 = vmatprep.subr.mxu0 0.0
        %349 = vmatpush2.msra.mxu0 0.0
        %350 = vmatprep.mubr.f32.mxu0 0.0
        %351 = vmatmul.mubr.f32.gmra.mxu0 %v278
        %v352 = vpop.f32.mrf.mxu0
        %v353 = vadd.f32 0.0, %v352
        %v354 = vpop.f32.mrf.mxu0
        %355 = vmatprep.mubr.f32.mxu0 0.0
        %356 = vmatmul.mubr.f32.gmra.mxu0 %v281
        %v357 = vpop.f32.mrf.mxu0
        %v358 = vadd.f32 0.0, %v357
        %v359 = vpop.f32.mrf.mxu0
        %360 = vdwg.mxu0
        %vm361 = vcmask 130048
        %362 = vst.msk [vmem:[%s185] sm:$0xff] %vm361, %v353
        %363 = vst.msk [vmem:[%s185 + $0x8] sm:$0xff] %vm361, %v358
        %v364 = vrot.slane %v272, 4
        %v365 = vsel %vm201, %v364, 0
        %367 = vmatprep.subr.mxu0 0.0
        %368 = vmatpush1.msra.mxu0 0.0
        %369 = vmatprep.subr.mxu0 0.0
        %370 = vmatpush1.msra.mxu0 0.0
        %371 = vmatprep.subr.mxu0 0.0
        %372 = vmatpush1.msra.mxu0 0.0
        %373 = vmatprep.subr.mxu0 0.0
        %374 = vmatpush1.msra.mxu0 0.0
        %375 = vmatprep.subr.mxu0 0.0
        %376 = vmatpush1.msra.mxu0 0.0
        %377 = vmatprep.subr.mxu0 0.0
        %378 = vmatpush1.msra.mxu0 0.0
        %379 = vmatprep.subr.mxu0 0.0
        %380 = vmatpush1.msra.mxu0 0.0
        %381 = vmatprep.subr.mxu0 0.0
        %382 = vmatpush1.msra.mxu0 0.0
        %383 = vmatprep.subr.mxu0 0.0
        %384 = vmatpush1.msra.mxu0 0.0
        %385 = vmatprep.subr.mxu0 0.0
        %386 = vmatpush1.msra.mxu0 0.0
        %387 = vmatprep.subr.mxu0 0.0
        %388 = vmatpush1.msra.mxu0 0.0
        %389 = vmatprep.subr.mxu0 0.0
        %390 = vmatpush1.msra.mxu0 0.0
        %391 = vmatprep.subr.mxu0 0.0
        %392 = vmatpush1.msra.mxu0 0.0
        %393 = vmatprep.subr.mxu0 0.0
        %394 = vmatpush1.msra.mxu0 0.0
        %395 = vmatprep.subr.mxu0 0.0
        %396 = vmatpush1.msra.mxu0 0.0
        %397 = vmatprep.subr.mxu0 0.0
        %398 = vmatpush1.msra.mxu0 %v365
        %399 = vmatprep.subr.mxu0 0.0
        %400 = vmatpush2.msra.mxu0 0.0
        %401 = vmatprep.subr.mxu0 0.0
        %402 = vmatpush2.msra.mxu0 0.0
        %403 = vmatprep.subr.mxu0 0.0
        %404 = vmatpush2.msra.mxu0 0.0
        %405 = vmatprep.subr.mxu0 0.0
        %406 = vmatpush2.msra.mxu0 0.0
        %407 = vmatprep.subr.mxu0 0.0
        %408 = vmatpush2.msra.mxu0 0.0
        %409 = vmatprep.subr.mxu0 0.0
        %410 = vmatpush2.msra.mxu0 0.0
        %411 = vmatprep.subr.mxu0 0.0
        %412 = vmatpush2.msra.mxu0 0.0
        %413 = vmatprep.subr.mxu0 0.0
        %414 = vmatpush2.msra.mxu0 0.0
        %415 = vmatprep.subr.mxu0 0.0
        %416 = vmatpush2.msra.mxu0 0.0
        %417 = vmatprep.subr.mxu0 0.0
        %418 = vmatpush2.msra.mxu0 0.0
        %419 = vmatprep.subr.mxu0 0.0
        %420 = vmatpush2.msra.mxu0 0.0
        %421 = vmatprep.subr.mxu0 0.0
        %422 = vmatpush2.msra.mxu0 0.0
        %423 = vmatprep.subr.mxu0 0.0
        %424 = vmatpush2.msra.mxu0 0.0
        %425 = vmatprep.subr.mxu0 0.0
        %426 = vmatpush2.msra.mxu0 0.0
        %427 = vmatprep.subr.mxu0 0.0
        %428 = vmatpush2.msra.mxu0 0.0
        %429 = vmatprep.subr.mxu0 0.0
        %430 = vmatpush2.msra.mxu0 0.0
        %431 = vmatprep.mubr.f32.mxu0 0.0
        %432 = vmatmul.mubr.f32.gmra.mxu0 %v278
        %v433 = vpop.f32.mrf.mxu0
        %v434 = vadd.f32 0.0, %v433
        %v435 = vpop.f32.mrf.mxu0
        %436 = vmatprep.mubr.f32.mxu0 0.0
        %437 = vmatmul.mubr.f32.gmra.mxu0 %v281
        %v438 = vpop.f32.mrf.mxu0
        %v439 = vadd.f32 0.0, %v438
        %v440 = vpop.f32.mrf.mxu0
        %441 = vdwg.mxu0
        %442 = vst.msk [vmem:[%s185 + $0x10] sm:$0xff] %vm361, %v434
        %443 = vst.msk [vmem:[%s185 + $0x18] sm:$0xff] %vm361, %v439
        %s444 = sand.u32 %s109, 1
        %s445 = scalar_lea.sflag [#allocation3], %s444
        %s446 = sand.u32 %s109, 1
        %s447 = smul.addr %s446, 32
        %s448 = scalar_lea.vmem [#allocation2], %s447
        // Predicated region
        $region33: #{_lambda_.4} parent=31 // pred_check
          %p449 = pneg %p119
        $region34: #{_lambda_.4} parent=31 // pred_check_branch
          %451 = sbr.rel (%p449) target = $region36
        $region35: #{_lambda_.4} parent=31 // pred_region
          %s452 = smul.u32 4, %s22
          %s454 = ssub.s32 512, 512
          %455 = vsyncadd %s445, %s454
          %s456 = smul.addr %s21, 8
          %s457 = sadd.s32 %s452, %s456
          %s458 = smul.addr %s457, 128
          %s459 = scalar_lea.hbm %s3, %s458
          %s460 = sshll.u32 %s448, 4
          %s461 = int_to_ptr.vmem [resolvable:$true] %s460
          %466 = dma.vmem_to_hbm [thread:$0]  %s461, 512, %s459, %s445, 128, 128, 8
        $region36: #{_lambda_.4} parent=31 // pred_fallthru
          _
      $region32: #{_lambda_.4} parent=5 // pred_fallthru
        _
      %p467 = scmp.le.s32.totalorder 2, %s12
      // Predicated region
      $region37: #{_lambda_.4} parent=5 // pred_check
        %p468 = pneg %p467
      $region38: #{_lambda_.4} parent=5 // pred_check_branch
        %470 = sbr.rel (%p468) target = $region40
      $region39: #{_lambda_.4} parent=5 // pred_region
        %s471 = ssub.s32 %s12, 2
        // Predicated region
        $region41: #{_lambda_.4} parent=39 // pred_check
          %p472 = pneg %p125
        $region42: #{_lambda_.4} parent=39 // pred_check_branch
          %474 = sbr.rel (%p472) target = $region44
        $region43: #{_lambda_.4} parent=39 // pred_region
          %s475 = sand.u32 %s110, 1
          %s476 = scalar_lea.sflag [#allocation3], %s475
          %s477 = sand.u32 %s110, 1
          %s478 = smul.addr %s477, 32
          %s479 = scalar_lea.vmem [#allocation2], %s478
          %480 = dma.done %s476, 512
        $region44: #{_lambda_.4} parent=39 // pred_fallthru
          _
      $region40: #{_lambda_.4} parent=5 // pred_fallthru
        _
    $region6: #{_lambda_.4} parent=1 // loop_footer
      %s16 = sadd.s32 1, %s12
    $region7: #{_lambda_.4} parent=1 // loop_footer_branch
      %11 = sbr.rel target = $region3
    $region8: #{_lambda_.4} parent=1 // loop_exit
      _
    %481 = vsyncpa [#allocation3], 1
    %s482 = scalar_lea.sflag [#allocation3], 1
    %483 = vsyncpa %s482, 1

</llo_original>
